<compile_context>
chip_gen: v5e
topology: v5e:2x2
jax: 0.10.0
libtpu: 0.0.40
codegen_flags: <defaults>
</compile_context>

<pallas_src>
from functools import lru_cache

import numpy as np
import jax
import jax.numpy as jnp
from jax.experimental import pallas as pl
from jax.experimental.pallas import tpu as pltpu


# Largest combined transform size K (= product of fused axis lengths) for which
# we build a single Kronecker DFT matrix.  (K, 2K) f32 top+bottom blocks then
# occupy at most 16 MiB -> safe to double-buffer even on v7x's 64 MiB VMEM.
_MAX_KRON_K = 1024


# ----------------------------------------------------------------------------
# Pallas kernel: one fused complex DFT as a stacked real matmul.
#   [yr | yi] = xr @ [Mr | Mi] + xi @ [-Mi | Mr]
# ----------------------------------------------------------------------------
def _stacked_dft_kernel(xr_ref, xi_ref, mt_ref, mb_ref, y_ref):
    y_ref[...] = (
        jnp.dot(xr_ref[...], mt_ref[...], preferred_element_type=jnp.float32)
        + jnp.dot(xi_ref[...], mb_ref[...], preferred_element_type=jnp.float32)
    )


@lru_cache(maxsize=None)
def _stacked_dft_matrices(dims, inverse):
    """Host-built, cached Kronecker (inverse-)DFT matrix in stacked real form.

    Returns (m_top, m_bot), each (K, 2K) float32, with K = prod(dims), such
    that [yr | yi] = xr @ m_top + xi @ m_bot implements y = x @ M for the
    complex Kronecker DFT matrix M (fft: exp(-2*pi*i*jk/n); ifft: /n, +sign).
    """
    m = np.ones((1, 1), dtype=np.complex128)
    for n in dims:
        k = np.arange(n)
        ang = 2.0 * np.pi * np.outer(k, k) / n
        w = np.exp(1j * ang) / n if inverse else np.exp(-1j * ang)
        m = np.kron(m, w)
    mr = np.ascontiguousarray(m.real).astype(np.float32)
    mi = np.ascontiguousarray(m.imag).astype(np.float32)
    m_top = np.concatenate([mr, mi], axis=1)    # (K, 2K)
    m_bot = np.concatenate([-mi, mr], axis=1)   # (K, 2K)
    return jnp.asarray(m_top), jnp.asarray(m_bot)


def _choose_tm(m_rows, k):
    """Row-block size: as large as the VMEM tile budget allows, divisor of
    m_rows when possible (no pad/slice), >=2 blocks for v7x when rows abound."""
    tile_budget = 8 * 1024 * 1024              # double-buffered xr+xi+y tiles
    cap = max(8, tile_budget // (32 * k))      # 32*tm*k bytes per double-buffered step
    cap = min(cap, 4096)
    if m_rows <= cap:
        # Prefer an even split into 2 blocks for v7x's two TensorCores when
        # there is plenty of row work; otherwise one full-height block.
        if m_rows >= 1024 and m_rows % 16 == 0 and (m_rows // 2) <= cap:
            return m_rows // 2
        return m_rows
    # Largest multiple of 8 that divides m_rows and fits the budget -> no padding.
    t = cap - cap % 8
    while t >= 8:
        if m_rows % t == 0:
            return t
        t -= 8
    # No clean divisor: fall back to padded tiling at the budget cap.
    return max(8, cap - cap % 8)


def _stacked_complex_matmul(xr2, xi2, m_top, m_bot):
    """(m, K) real/imag planes -> (m, 2K) = [yr | yi] via one fused pallas_call."""
    m_rows, k = xr2.shape
    two_k = 2 * k
    tm = _choose_tm(m_rows, k)

    m_pad = -(-m_rows // tm) * tm
    if m_pad != m_rows:  # only taken when no divisor-of-m tile was available
        pad = ((0, m_pad - m_rows), (0, 0))
        xr2 = jnp.pad(xr2, pad)
        xi2 = jnp.pad(xi2, pad)

    grid = (m_pad // tm,)
    data_spec = pl.BlockSpec((tm, k), lambda i: (i, 0))
    mat_spec = pl.BlockSpec((k, two_k), lambda i: (0, 0))
    out_spec = pl.BlockSpec((tm, two_k), lambda i: (i, 0))

    matrix_bytes = 2 * k * two_k * 4
    tile_step_bytes = 4 * (2 * tm * k + tm * two_k)
    vmem_limit = int(min(2 * matrix_bytes + 2 * tile_step_bytes + (24 << 20),
                         64 << 20))

    cost = pl.CostEstimate(
        flops=2 * 2 * m_pad * k * two_k,
        transcendentals=0,
        bytes_accessed=4 * (2 * m_pad * k + 2 * k * two_k + m_pad * two_k),
    )

    y2 = pl.pallas_call(
        _stacked_dft_kernel,
        out_shape=jax.ShapeDtypeStruct((m_pad, two_k), jnp.float32),
        grid_spec=pltpu.PrefetchScalarGridSpec(
            num_scalar_prefetch=0,
            grid=grid,
            in_specs=[data_spec, data_spec, mat_spec, mat_spec],
            out_specs=out_spec,
        ),
        compiler_params=pltpu.CompilerParams(
            dimension_semantics=("parallel",),
            vmem_limit_bytes=vmem_limit,
        ),
        cost_estimate=cost,
    )(xr2, xi2, m_top, m_bot)

    if m_pad != m_rows:
        y2 = y2[:m_rows]
    return y2


# ----------------------------------------------------------------------------
# Axis grouping: fuse as many contiguous transform axes as fit the matrix cap.
# ----------------------------------------------------------------------------
def _group_axes(shape, axes):
    ndim = len(shape)
    axes = sorted(a % ndim for a in axes)
    groups = []
    cur = [axes[-1]]
    cur_k = shape[axes[-1]]
    for a in reversed(axes[:-1]):
        if a == cur[0] - 1 and cur_k * shape[a] <= _MAX_KRON_K:
            cur.insert(0, a)
            cur_k *= shape[a]
        else:
            groups.append(tuple(cur))
            cur, cur_k = [a], shape[a]
    groups.append(tuple(cur))
    return groups


def _apply_axis_group(xr, xi, group, inverse):
    ndim = xr.ndim
    n_ax = len(group)
    last = tuple(range(ndim - n_ax, ndim))
    moved = tuple(group) != last
    if moved:
        xr = jnp.moveaxis(xr, group, last)
        xi = jnp.moveaxis(xi, group, last)
    shape = xr.shape
    dims = tuple(int(d) for d in shape[-n_ax:])
    k = int(np.prod(dims))
    m_rows = int(np.prod(shape[:-n_ax])) if ndim > n_ax else 1

    m_top, m_bot = _stacked_dft_matrices(dims, bool(inverse))
    y2 = _stacked_complex_matmul(xr.reshape(m_rows, k), xi.reshape(m_rows, k),
                                 m_top, m_bot)
    yr = y2[:, :k].reshape(shape)
    yi = y2[:, k:].reshape(shape)
    if moved:
        yr = jnp.moveaxis(yr, last, group)
        yi = jnp.moveaxis(yi, last, group)
    return yr, yi


def _dft_axes(xr, xi, axes, inverse):
    """Separable N-D (inverse) DFT; trailing axes are fused into one kernel."""
    for group in _group_axes(xr.shape, axes):
        xr, xi = _apply_axis_group(xr, xi, group, inverse)
    return xr, xi


# ----------------------------------------------------------------------------
# Module-level jitted entry points (fuses the cheap reshape/slice/complex glue).
# ----------------------------------------------------------------------------
@jax.jit
def _fourier_merge_impl(real, imag):
    yr, yi = _dft_axes(real.astype(jnp.float32), imag.astype(jnp.float32),
                       axes=(-3, -2, -1), inverse=True)
    return jax.lax.complex(yr, yi)


@jax.jit
def _fourier_split_impl(x):
    xr = x.astype(jnp.float32)
    xi = jnp.zeros_like(xr)
    # torch.fft.fftn default dims=None transforms over ALL axes (incl. batch
    # and channel); kept identical here.
    return _dft_axes(xr, xi, axes=tuple(range(x.ndim)), inverse=False)


class Fourier3dCustom:
    """JAX/Pallas port of the PyTorch Fourier3dCustom module."""

    def __init__(self, **kwargs):
        self.split = kwargs.get('split', False)

    def __call__(self, inputs):
        return self.fourier_split(inputs) if self.split else self.fourier_merge(inputs)

    def fourier_split(self, inputs):
        yr, yi = _fourier_split_impl(jnp.asarray(inputs))
        return (yr, yi)

    def fourier_merge(self, inputs):
        real, imag = inputs[0], inputs[1]
        return _fourier_merge_impl(jnp.asarray(real), jnp.asarray(imag))


if __name__ == "__main__":
    key = jax.random.PRNGKey(0)
    kr, ki = jax.random.split(key)
    B, C, D, H, W = 2, 4, 8, 8, 8
    real = jax.random.normal(kr, (B, C, D, H, W), dtype=jnp.float32)
    imag = jax.random.normal(ki, (B, C, D, H, W), dtype=jnp.float32)

    # Default module config (split=False) -> fourier_merge path.
    mod = Fourier3dCustom()
    out = mod((real, imag))
    out = jax.block_until_ready(out)

    # Reference: jnp.fft.ifftn over the last three dims (mirrors torch.fft.ifftn).
    ref = jnp.fft.ifftn(jax.lax.complex(real, imag), axes=(-3, -2, -1))
    err = float(jnp.max(jnp.abs(out - ref)))

    assert out.shape == (B, C, D, H, W)
    assert out.dtype == jnp.complex64
    assert err < 1e-3, f"max abs error too large: {err}"
    print("KERNEL_OK")
</pallas_src>

<mosaic_0001>
module attributes {stable_mosaic.version = 11 : i64} {
  func.func @_stacked_dft_kernel(%arg0: i32, %arg1: memref<8x512xf32, #tpu.memory_space<vmem>>, %arg2: memref<8x512xf32, #tpu.memory_space<vmem>>, %arg3: memref<512x1024xf32, #tpu.memory_space<vmem>>, %arg4: memref<512x1024xf32, #tpu.memory_space<vmem>>, %arg5: memref<8x1024xf32, #tpu.memory_space<vmem>>) attributes {dimension_semantics = [#tpu.dimension_semantics<parallel>], iteration_bounds = array<i64: 1>, scalar_prefetch = 0 : i64, scratch_operands = 0 : i64, tpu.core_type = #tpu.core_type<tc>, window_params = [{transform_indices = @transform_0, window_bounds = array<i64: 8, 512>}, {transform_indices = @transform_1, window_bounds = array<i64: 8, 512>}, {pipeline_mode = #tpu.pipeline_mode<synchronous>, transform_indices = @transform_2, window_bounds = array<i64: 512, 1024>}, {pipeline_mode = #tpu.pipeline_mode<synchronous>, transform_indices = @transform_3, window_bounds = array<i64: 512, 1024>}, {transform_indices = @transform_4, window_bounds = array<i64: 8, 1024>}]} {
    %c0 = arith.constant 0 : index
    %c0_0 = arith.constant 0 : index
    %0 = vector.load %arg1[%c0, %c0_0] : memref<8x512xf32, #tpu.memory_space<vmem>>, vector<8x512xf32>
    %c0_1 = arith.constant 0 : index
    %c0_2 = arith.constant 0 : index
    %1 = vector.load %arg3[%c0_1, %c0_2] : memref<512x1024xf32, #tpu.memory_space<vmem>>, vector<512x1024xf32>
    %cst = arith.constant dense<0.000000e+00> : vector<8x1024xf32>
    %2 = tpu.matmul %0, %1, %cst {dimension_numbers = #tpu.dot_dimension_numbers<[1], [0], [0], [1], [0, 0, 1, 1], [], []>} : vector<8x512xf32>, vector<512x1024xf32>, vector<8x1024xf32> -> vector<8x1024xf32>
    %c0_3 = arith.constant 0 : index
    %c0_4 = arith.constant 0 : index
    %3 = vector.load %arg2[%c0_3, %c0_4] : memref<8x512xf32, #tpu.memory_space<vmem>>, vector<8x512xf32>
    %c0_5 = arith.constant 0 : index
    %c0_6 = arith.constant 0 : index
    %4 = vector.load %arg4[%c0_5, %c0_6] : memref<512x1024xf32, #tpu.memory_space<vmem>>, vector<512x1024xf32>
    %cst_7 = arith.constant dense<0.000000e+00> : vector<8x1024xf32>
    %5 = tpu.matmul %3, %4, %cst_7 {dimension_numbers = #tpu.dot_dimension_numbers<[1], [0], [0], [1], [0, 0, 1, 1], [], []>} : vector<8x512xf32>, vector<512x1024xf32>, vector<8x1024xf32> -> vector<8x1024xf32>
    %6 = arith.addf %2, %5 : vector<8x1024xf32>
    %c0_8 = arith.constant 0 : index
    %c0_9 = arith.constant 0 : index
    %7 = vector.load %arg5[%c0_8, %c0_9] : memref<8x1024xf32, #tpu.memory_space<vmem>>, vector<8x1024xf32>
    tpu.vector_store %arg5[%c0_8, %c0_9], %6 {strides = array<i32>} : memref<8x1024xf32, #tpu.memory_space<vmem>>, vector<8x1024xf32>,
    return
  }
  func.func @transform_0(%arg0: i32) -> (i32, i32) {
    %c0_i32 = arith.constant 0 : i32
    %c0_i32_0 = arith.constant 0 : i32
    return %arg0, %c0_i32 : i32, i32
  }
  func.func @transform_1(%arg0: i32) -> (i32, i32) {
    %c0_i32 = arith.constant 0 : i32
    %c0_i32_0 = arith.constant 0 : i32
    return %arg0, %c0_i32 : i32, i32
  }
  func.func @transform_2(%arg0: i32) -> (i32, i32) {
    %c0_i32 = arith.constant 0 : i32
    %c0_i32_0 = arith.constant 0 : i32
    %c0_i32_1 = arith.constant 0 : i32
    return %c0_i32, %c0_i32_0 : i32, i32
  }
  func.func @transform_3(%arg0: i32) -> (i32, i32) {
    %c0_i32 = arith.constant 0 : i32
    %c0_i32_0 = arith.constant 0 : i32
    %c0_i32_1 = arith.constant 0 : i32
    return %c0_i32, %c0_i32_0 : i32, i32
  }
  func.func @transform_4(%arg0: i32) -> (i32, i32) {
    %c0_i32 = arith.constant 0 : i32
    %c0_i32_0 = arith.constant 0 : i32
    return %arg0, %c0_i32 : i32, i32
  }
}

</mosaic_0001>

<llo_original>
// kernel: custom-call
$region0: #{custom-call}
  %s0 = inlined_call_operand.vmem [shape: f32[2,4,8,8,8], index: 0, kind: input, shape index: {}]
  %s1 = inlined_call_operand.vmem [shape: f32[2,4,8,8,8], index: 1, kind: input, shape index: {}]
  %s2 = inlined_call_operand.hbm [shape: c64[2,4,8,8,8], index: 2, kind: output, shape index: {}]
  %s3 = scalar_lea.hbm %s2, 512
  $region1: #{custom-call} parent=0
    #allocation0 [shape = 's32[1]{0}', space=sflag, size = 0x4, scoped, tag = 'scoped memory for custom-call']
    %4 = vsyncpa [#allocation0], 0
    %s6 = sshll.u32 %s0, 4
    %s7 = int_to_ptr.vmem [resolvable:$true] %s6
    %s8 = sshll.u32 %s2, 4
    %s9 = int_to_ptr.hbm [resolvable:$true] %s8
    %11 = dma.vmem_to_hbm [thread:$0]  %s7, 8192, %s9, [#allocation0]
    %13 = dma.done [#allocation0], 8192
    %14 = vsyncpa [#allocation0], 1
  $region2: #{custom-call} parent=0
    #allocation1 [shape = 's32[1]{0}', space=sflag, size = 0x4, scoped, tag = 'scoped memory for custom-call']
    %15 = vsyncpa [#allocation1], 0
    %s17 = sshll.u32 %s1, 4
    %s18 = int_to_ptr.vmem [resolvable:$true] %s17
    %s19 = sshll.u32 %s3, 4
    %s20 = int_to_ptr.hbm [resolvable:$true] %s19
    %22 = dma.vmem_to_hbm [thread:$0]  %s18, 8192, %s20, [#allocation1]
    %24 = dma.done [#allocation1], 8192
    %25 = vsyncpa [#allocation1], 1

// kernel: _fourier_merge_impl.1
$region0: #{_fourier_merge_impl.1}
  #allocation0 [shape = 'u32[]', space=smem, size = 0x4, offset = 0x4, fixed_abs, tag = 'smem constant byte address 0x4 - core index']
  #allocation1 [shape = 'u32[72,128]{1,0:T(1,128)}', space=vmem, size = 0x9000, scoped, tag = 'internal scratch']
  %s0 = inlined_call_operand.vmem [shape: f32[8,512], index: 0, kind: input, shape index: {}]
  %s1 = inlined_call_operand.vmem [shape: f32[8,512], index: 1, kind: input, shape index: {}]
  %s2 = inlined_call_operand.hbm [shape: f32[512,1024], index: 2, kind: input, shape index: {}]
  %s3 = inlined_call_operand.hbm [shape: f32[512,1024], index: 3, kind: input, shape index: {}]
  %s4 = inlined_call_operand.vmem [shape: f32[8,1024], index: 4, kind: output, shape index: {}]
  %s5 = sld [smem:[#allocation0]]
  $region34: #{_fourier_merge_impl.1} parent=0
    _
  %s7 = ssub.s32 1, %s5
  %s8 = scalar_select 0, %s7, %s5
  $region1: #{_fourier_merge_impl.1} parent=0
    #allocation2 [shape = 'u8[2097152]{0}', space=vmem, size = 0x200000, scoped, tag = 'input window, operand 2, single buffered']
    #allocation3 [shape = 's32[1]{0}', space=sflag, size = 0x4, scoped, tag = 'scoped memory for _fourier_merge_impl.1']
    #allocation4 [shape = 'u8[2097152]{0}', space=vmem, size = 0x200000, scoped, tag = 'input window, operand 3, single buffered']
    #allocation5 [shape = 's32[1]{0}', space=sflag, size = 0x4, scoped, tag = 'scoped memory for _fourier_merge_impl.1']
    %9 = vsyncpa [#allocation3], 0
    %10 = vsyncpa [#allocation5], 0
    // Predicated region
    $region2: #{_fourier_merge_impl.1} parent=1 // pred_check
      _
    $region3: #{_fourier_merge_impl.1} parent=1 // pred_check_branch
      %12 = sbr.rel (0) target = $region5
    $region4: #{_fourier_merge_impl.1} parent=1 // pred_region
      _
    $region5: #{_fourier_merge_impl.1} parent=1 // pred_fallthru
      _
    // Predicated region
    $region6: #{_fourier_merge_impl.1} parent=1 // pred_check
      _
    $region7: #{_fourier_merge_impl.1} parent=1 // pred_check_branch
      %14 = sbr.rel (0) target = $region9
    $region8: #{_fourier_merge_impl.1} parent=1 // pred_region
      _
    $region9: #{_fourier_merge_impl.1} parent=1 // pred_fallthru
      _
    // Predicated region
    $region10: #{_fourier_merge_impl.1} parent=1 // pred_check
      _
    $region11: #{_fourier_merge_impl.1} parent=1 // pred_check_branch
      %16 = sbr.rel (0) target = $region13
    $region12: #{_fourier_merge_impl.1} parent=1 // pred_region
      %18 = vsyncadd [#allocation3], 0
      %s19 = sshll.u32 %s2, 4
      %s20 = int_to_ptr.hbm [resolvable:$true] %s19
      %s21 = sshll.u32 [#allocation2], 4
      %s22 = int_to_ptr.vmem [resolvable:$true] %s21
      %27 = dma.hbm_to_vmem [thread:$0]  %s20, 65536, %s22, [#allocation3], 1024, 1024, 64
    $region13: #{_fourier_merge_impl.1} parent=1 // pred_fallthru
      _
    // Predicated region
    $region14: #{_fourier_merge_impl.1} parent=1 // pred_check
      _
    $region15: #{_fourier_merge_impl.1} parent=1 // pred_check_branch
      %29 = sbr.rel (0) target = $region17
    $region16: #{_fourier_merge_impl.1} parent=1 // pred_region
      %31 = vsyncadd [#allocation5], 0
      %s32 = sshll.u32 %s3, 4
      %s33 = int_to_ptr.hbm [resolvable:$true] %s32
      %s34 = sshll.u32 [#allocation4], 4
      %s35 = int_to_ptr.vmem [resolvable:$true] %s34
      %40 = dma.hbm_to_vmem [thread:$0]  %s33, 65536, %s35, [#allocation5], 1024, 1024, 64
    $region17: #{_fourier_merge_impl.1} parent=1 // pred_fallthru
      _
    // Predicated region
    $region18: #{_fourier_merge_impl.1} parent=1 // pred_check
      _
    $region19: #{_fourier_merge_impl.1} parent=1 // pred_check_branch
      %42 = sbr.rel (0) target = $region21
    $region20: #{_fourier_merge_impl.1} parent=1 // pred_region
      %44 = dma.done [#allocation3], 65536
    $region21: #{_fourier_merge_impl.1} parent=1 // pred_fallthru
      _
    // Predicated region
    $region22: #{_fourier_merge_impl.1} parent=1 // pred_check
      _
    $region23: #{_fourier_merge_impl.1} parent=1 // pred_check_branch
      %46 = sbr.rel (0) target = $region25
    $region24: #{_fourier_merge_impl.1} parent=1 // pred_region
      %48 = dma.done [#allocation5], 65536
    $region25: #{_fourier_merge_impl.1} parent=1 // pred_fallthru
      _
    %v49 = vld [vmem:[%s0] sm:$0xff]
    %v50 = vld [vmem:[%s0 + $0x8] sm:$0xff]
    %v51 = vld [vmem:[%s0 + $0x10] sm:$0xff]
    %v52 = vld [vmem:[%s0 + $0x18] sm:$0xff]
    %v53 = vld [vmem:[#allocation2] sm:$0xff]
    %v54 = vld [vmem:[#allocation2 + $0x8] sm:$0xff]
    %v55 = vld [vmem:[#allocation2 + $0x10] sm:$0xff]
    %v56 = vld [vmem:[#allocation2 + $0x18] sm:$0xff]
    %v57 = vld [vmem:[#allocation2 + $0x20] sm:$0xff]
    %v58 = vld [vmem:[#allocation2 + $0x28] sm:$0xff]
    %v59 = vld [vmem:[#allocation2 + $0x30] sm:$0xff]
    %v60 = vld [vmem:[#allocation2 + $0x38] sm:$0xff]
    %v61 = vld [vmem:[#allocation2 + $0x40] sm:$0xff]
    %v62 = vld [vmem:[#allocation2 + $0x48] sm:$0xff]
    %v63 = vld [vmem:[#allocation2 + $0x50] sm:$0xff]
    %v64 = vld [vmem:[#allocation2 + $0x58] sm:$0xff]
    %v65 = vld [vmem:[#allocation2 + $0x60] sm:$0xff]
    %v66 = vld [vmem:[#allocation2 + $0x68] sm:$0xff]
    %v67 = vld [vmem:[#allocation2 + $0x70] sm:$0xff]
    %v68 = vld [vmem:[#allocation2 + $0x78] sm:$0xff]
    %v69 = vld [vmem:[#allocation2 + $0x80] sm:$0xff]
    %v70 = vld [vmem:[#allocation2 + $0x88] sm:$0xff]
    %v71 = vld [vmem:[#allocation2 + $0x90] sm:$0xff]
    %v72 = vld [vmem:[#allocation2 + $0x98] sm:$0xff]
    %v73 = vld [vmem:[#allocation2 + $0xa0] sm:$0xff]
    %v74 = vld [vmem:[#allocation2 + $0xa8] sm:$0xff]
    %v75 = vld [vmem:[#allocation2 + $0xb0] sm:$0xff]
    %v76 = vld [vmem:[#allocation2 + $0xb8] sm:$0xff]
    %v77 = vld [vmem:[#allocation2 + $0xc0] sm:$0xff]
    %v78 = vld [vmem:[#allocation2 + $0xc8] sm:$0xff]
    %v79 = vld [vmem:[#allocation2 + $0xd0] sm:$0xff]
    %v80 = vld [vmem:[#allocation2 + $0xd8] sm:$0xff]
    %v81 = vld [vmem:[#allocation2 + $0xe0] sm:$0xff]
    %v82 = vld [vmem:[#allocation2 + $0xe8] sm:$0xff]
    %v83 = vld [vmem:[#allocation2 + $0xf0] sm:$0xff]
    %v84 = vld [vmem:[#allocation2 + $0xf8] sm:$0xff]
    %v85 = vld [vmem:[#allocation2 + $0x100] sm:$0xff]
    %v86 = vld [vmem:[#allocation2 + $0x108] sm:$0xff]
    %v87 = vld [vmem:[#allocation2 + $0x110] sm:$0xff]
    %v88 = vld [vmem:[#allocation2 + $0x118] sm:$0xff]
    %v89 = vld [vmem:[#allocation2 + $0x120] sm:$0xff]
    %v90 = vld [vmem:[#allocation2 + $0x128] sm:$0xff]
    %v91 = vld [vmem:[#allocation2 + $0x130] sm:$0xff]
    %v92 = vld [vmem:[#allocation2 + $0x138] sm:$0xff]
    %v93 = vld [vmem:[#allocation2 + $0x140] sm:$0xff]
    %v94 = vld [vmem:[#allocation2 + $0x148] sm:$0xff]
    %v95 = vld [vmem:[#allocation2 + $0x150] sm:$0xff]
    %v96 = vld [vmem:[#allocation2 + $0x158] sm:$0xff]
    %v97 = vld [vmem:[#allocation2 + $0x160] sm:$0xff]
    %v98 = vld [vmem:[#allocation2 + $0x168] sm:$0xff]
    %v99 = vld [vmem:[#allocation2 + $0x170] sm:$0xff]
    %v100 = vld [vmem:[#allocation2 + $0x178] sm:$0xff]
    %v101 = vld [vmem:[#allocation2 + $0x180] sm:$0xff]
    %v102 = vld [vmem:[#allocation2 + $0x188] sm:$0xff]
    %v103 = vld [vmem:[#allocation2 + $0x190] sm:$0xff]
    %v104 = vld [vmem:[#allocation2 + $0x198] sm:$0xff]
    %v105 = vld [vmem:[#allocation2 + $0x1a0] sm:$0xff]
    %v106 = vld [vmem:[#allocation2 + $0x1a8] sm:$0xff]
    %v107 = vld [vmem:[#allocation2 + $0x1b0] sm:$0xff]
    %v108 = vld [vmem:[#allocation2 + $0x1b8] sm:$0xff]
    %v109 = vld [vmem:[#allocation2 + $0x1c0] sm:$0xff]
    %v110 = vld [vmem:[#allocation2 + $0x1c8] sm:$0xff]
    %v111 = vld [vmem:[#allocation2 + $0x1d0] sm:$0xff]
    %v112 = vld [vmem:[#allocation2 + $0x1d8] sm:$0xff]
    %v113 = vld [vmem:[#allocation2 + $0x1e0] sm:$0xff]
    %v114 = vld [vmem:[#allocation2 + $0x1e8] sm:$0xff]
    %v115 = vld [vmem:[#allocation2 + $0x1f0] sm:$0xff]
    %v116 = vld [vmem:[#allocation2 + $0x1f8] sm:$0xff]
    %v117 = vld [vmem:[#allocation2 + $0x200] sm:$0xff]
    %v118 = vld [vmem:[#allocation2 + $0x208] sm:$0xff]
    %v119 = vld [vmem:[#allocation2 + $0x210] sm:$0xff]
    %v120 = vld [vmem:[#allocation2 + $0x218] sm:$0xff]
    %v121 = vld [vmem:[#allocation2 + $0x220] sm:$0xff]
    %v122 = vld [vmem:[#allocation2 + $0x228] sm:$0xff]
    %v123 = vld [vmem:[#allocation2 + $0x230] sm:$0xff]
    %v124 = vld [vmem:[#allocation2 + $0x238] sm:$0xff]
    %v125 = vld [vmem:[#allocation2 + $0x240] sm:$0xff]
    %v126 = vld [vmem:[#allocation2 + $0x248] sm:$0xff]
    %v127 = vld [vmem:[#allocation2 + $0x250] sm:$0xff]
    %v128 = vld [vmem:[#allocation2 + $0x258] sm:$0xff]
    %v129 = vld [vmem:[#allocation2 + $0x260] sm:$0xff]
    %v130 = vld [vmem:[#allocation2 + $0x268] sm:$0xff]
    %v131 = vld [vmem:[#allocation2 + $0x270] sm:$0xff]
    %v132 = vld [vmem:[#allocation2 + $0x278] sm:$0xff]
    %v133 = vld [vmem:[#allocation2 + $0x280] sm:$0xff]
    %v134 = vld [vmem:[#allocation2 + $0x288] sm:$0xff]
    %v135 = vld [vmem:[#allocation2 + $0x290] sm:$0xff]
    %v136 = vld [vmem:[#allocation2 + $0x298] sm:$0xff]
    %v137 = vld [vmem:[#allocation2 + $0x2a0] sm:$0xff]
    %v138 = vld [vmem:[#allocation2 + $0x2a8] sm:$0xff]
    %v139 = vld [vmem:[#allocation2 + $0x2b0] sm:$0xff]
    %v140 = vld [vmem:[#allocation2 + $0x2b8] sm:$0xff]
    %v141 = vld [vmem:[#allocation2 + $0x2c0] sm:$0xff]
    %v142 = vld [vmem:[#allocation2 + $0x2c8] sm:$0xff]
    %v143 = vld [vmem:[#allocation2 + $0x2d0] sm:$0xff]
    %v144 = vld [vmem:[#allocation2 + $0x2d8] sm:$0xff]
    %v145 = vld [vmem:[#allocation2 + $0x2e0] sm:$0xff]
    %v146 = vld [vmem:[#allocation2 + $0x2e8] sm:$0xff]
    %v147 = vld [vmem:[#allocation2 + $0x2f0] sm:$0xff]
    %v148 = vld [vmem:[#allocation2 + $0x2f8] sm:$0xff]
    %v149 = vld [vmem:[#allocation2 + $0x300] sm:$0xff]
    %v150 = vld [vmem:[#allocation2 + $0x308] sm:$0xff]
    %v151 = vld [vmem:[#allocation2 + $0x310] sm:$0xff]
    %v152 = vld [vmem:[#allocation2 + $0x318] sm:$0xff]
    %v153 = vld [vmem:[#allocation2 + $0x320] sm:$0xff]
    %v154 = vld [vmem:[#allocation2 + $0x328] sm:$0xff]
    %v155 = vld [vmem:[#allocation2 + $0x330] sm:$0xff]
    %v156 = vld [vmem:[#allocation2 + $0x338] sm:$0xff]
    %v157 = vld [vmem:[#allocation2 + $0x340] sm:$0xff]
    %v158 = vld [vmem:[#allocation2 + $0x348] sm:$0xff]
    %v159 = vld [vmem:[#allocation2 + $0x350] sm:$0xff]
    %v160 = vld [vmem:[#allocation2 + $0x358] sm:$0xff]
    %v161 = vld [vmem:[#allocation2 + $0x360] sm:$0xff]
    %v162 = vld [vmem:[#allocation2 + $0x368] sm:$0xff]
    %v163 = vld [vmem:[#allocation2 + $0x370] sm:$0xff]
    %v164 = vld [vmem:[#allocation2 + $0x378] sm:$0xff]
    %v165 = vld [vmem:[#allocation2 + $0x380] sm:$0xff]
    %v166 = vld [vmem:[#allocation2 + $0x388] sm:$0xff]
    %v167 = vld [vmem:[#allocation2 + $0x390] sm:$0xff]
    %v168 = vld [vmem:[#allocation2 + $0x398] sm:$0xff]
    %v169 = vld [vmem:[#allocation2 + $0x3a0] sm:$0xff]
    %v170 = vld [vmem:[#allocation2 + $0x3a8] sm:$0xff]
    %v171 = vld [vmem:[#allocation2 + $0x3b0] sm:$0xff]
    %v172 = vld [vmem:[#allocation2 + $0x3b8] sm:$0xff]
    %v173 = vld [vmem:[#allocation2 + $0x3c0] sm:$0xff]
    %v174 = vld [vmem:[#allocation2 + $0x3c8] sm:$0xff]
    %v175 = vld [vmem:[#allocation2 + $0x3d0] sm:$0xff]
    %v176 = vld [vmem:[#allocation2 + $0x3d8] sm:$0xff]
    %v177 = vld [vmem:[#allocation2 + $0x3e0] sm:$0xff]
    %v178 = vld [vmem:[#allocation2 + $0x3e8] sm:$0xff]
    %v179 = vld [vmem:[#allocation2 + $0x3f0] sm:$0xff]
    %v180 = vld [vmem:[#allocation2 + $0x3f8] sm:$0xff]
    %v181 = vld [vmem:[#allocation2 + $0x400] sm:$0xff]
    %v182 = vld [vmem:[#allocation2 + $0x408] sm:$0xff]
    %v183 = vld [vmem:[#allocation2 + $0x410] sm:$0xff]
    %v184 = vld [vmem:[#allocation2 + $0x418] sm:$0xff]
    %v185 = vld [vmem:[#allocation2 + $0x420] sm:$0xff]
    %v186 = vld [vmem:[#allocation2 + $0x428] sm:$0xff]
    %v187 = vld [vmem:[#allocation2 + $0x430] sm:$0xff]
    %v188 = vld [vmem:[#allocation2 + $0x438] sm:$0xff]
    %v189 = vld [vmem:[#allocation2 + $0x440] sm:$0xff]
    %v190 = vld [vmem:[#allocation2 + $0x448] sm:$0xff]
    %v191 = vld [vmem:[#allocation2 + $0x450] sm:$0xff]
    %v192 = vld [vmem:[#allocation2 + $0x458] sm:$0xff]
    %v193 = vld [vmem:[#allocation2 + $0x460] sm:$0xff]
    %v194 = vld [vmem:[#allocation2 + $0x468] sm:$0xff]
    %v195 = vld [vmem:[#allocation2 + $0x470] sm:$0xff]
    %v196 = vld [vmem:[#allocation2 + $0x478] sm:$0xff]
    %v197 = vld [vmem:[#allocation2 + $0x480] sm:$0xff]
    %v198 = vld [vmem:[#allocation2 + $0x488] sm:$0xff]
    %v199 = vld [vmem:[#allocation2 + $0x490] sm:$0xff]
    %v200 = vld [vmem:[#allocation2 + $0x498] sm:$0xff]
    %v201 = vld [vmem:[#allocation2 + $0x4a0] sm:$0xff]
    %v202 = vld [vmem:[#allocation2 + $0x4a8] sm:$0xff]
    %v203 = vld [vmem:[#allocation2 + $0x4b0] sm:$0xff]
    %v204 = vld [vmem:[#allocation2 + $0x4b8] sm:$0xff]
    %v205 = vld [vmem:[#allocation2 + $0x4c0] sm:$0xff]
    %v206 = vld [vmem:[#allocation2 + $0x4c8] sm:$0xff]
    %v207 = vld [vmem:[#allocation2 + $0x4d0] sm:$0xff]
    %v208 = vld [vmem:[#allocation2 + $0x4d8] sm:$0xff]
    %v209 = vld [vmem:[#allocation2 + $0x4e0] sm:$0xff]
    %v210 = vld [vmem:[#allocation2 + $0x4e8] sm:$0xff]
    %v211 = vld [vmem:[#allocation2 + $0x4f0] sm:$0xff]
    %v212 = vld [vmem:[#allocation2 + $0x4f8] sm:$0xff]
    %v213 = vld [vmem:[#allocation2 + $0x500] sm:$0xff]
    %v214 = vld [vmem:[#allocation2 + $0x508] sm:$0xff]
    %v215 = vld [vmem:[#allocation2 + $0x510] sm:$0xff]
    %v216 = vld [vmem:[#allocation2 + $0x518] sm:$0xff]
    %v217 = vld [vmem:[#allocation2 + $0x520] sm:$0xff]
    %v218 = vld [vmem:[#allocation2 + $0x528] sm:$0xff]
    %v219 = vld [vmem:[#allocation2 + $0x530] sm:$0xff]
    %v220 = vld [vmem:[#allocation2 + $0x538] sm:$0xff]
    %v221 = vld [vmem:[#allocation2 + $0x540] sm:$0xff]
    %v222 = vld [vmem:[#allocation2 + $0x548] sm:$0xff]
    %v223 = vld [vmem:[#allocation2 + $0x550] sm:$0xff]
    %v224 = vld [vmem:[#allocation2 + $0x558] sm:$0xff]
    %v225 = vld [vmem:[#allocation2 + $0x560] sm:$0xff]
    %v226 = vld [vmem:[#allocation2 + $0x568] sm:$0xff]
    %v227 = vld [vmem:[#allocation2 + $0x570] sm:$0xff]
    %v228 = vld [vmem:[#allocation2 + $0x578] sm:$0xff]
    %v229 = vld [vmem:[#allocation2 + $0x580] sm:$0xff]
    %v230 = vld [vmem:[#allocation2 + $0x588] sm:$0xff]
    %v231 = vld [vmem:[#allocation2 + $0x590] sm:$0xff]
    %v232 = vld [vmem:[#allocation2 + $0x598] sm:$0xff]
    %v233 = vld [vmem:[#allocation2 + $0x5a0] sm:$0xff]
    %v234 = vld [vmem:[#allocation2 + $0x5a8] sm:$0xff]
    %v235 = vld [vmem:[#allocation2 + $0x5b0] sm:$0xff]
    %v236 = vld [vmem:[#allocation2 + $0x5b8] sm:$0xff]
    %v237 = vld [vmem:[#allocation2 + $0x5c0] sm:$0xff]
    %v238 = vld [vmem:[#allocation2 + $0x5c8] sm:$0xff]
    %v239 = vld [vmem:[#allocation2 + $0x5d0] sm:$0xff]
    %v240 = vld [vmem:[#allocation2 + $0x5d8] sm:$0xff]
    %v241 = vld [vmem:[#allocation2 + $0x5e0] sm:$0xff]
    %v242 = vld [vmem:[#allocation2 + $0x5e8] sm:$0xff]
    %v243 = vld [vmem:[#allocation2 + $0x5f0] sm:$0xff]
    %v244 = vld [vmem:[#allocation2 + $0x5f8] sm:$0xff]
    %v245 = vld [vmem:[#allocation2 + $0x600] sm:$0xff]
    %v246 = vld [vmem:[#allocation2 + $0x608] sm:$0xff]
    %v247 = vld [vmem:[#allocation2 + $0x610] sm:$0xff]
    %v248 = vld [vmem:[#allocation2 + $0x618] sm:$0xff]
    %v249 = vld [vmem:[#allocation2 + $0x620] sm:$0xff]
    %v250 = vld [vmem:[#allocation2 + $0x628] sm:$0xff]
    %v251 = vld [vmem:[#allocation2 + $0x630] sm:$0xff]
    %v252 = vld [vmem:[#allocation2 + $0x638] sm:$0xff]
    %v253 = vld [vmem:[#allocation2 + $0x640] sm:$0xff]
    %v254 = vld [vmem:[#allocation2 + $0x648] sm:$0xff]
    %v255 = vld [vmem:[#allocation2 + $0x650] sm:$0xff]
    %v256 = vld [vmem:[#allocation2 + $0x658] sm:$0xff]
    %v257 = vld [vmem:[#allocation2 + $0x660] sm:$0xff]
    %v258 = vld [vmem:[#allocation2 + $0x668] sm:$0xff]
    %v259 = vld [vmem:[#allocation2 + $0x670] sm:$0xff]
    %v260 = vld [vmem:[#allocation2 + $0x678] sm:$0xff]
    %v261 = vld [vmem:[#allocation2 + $0x680] sm:$0xff]
    %v262 = vld [vmem:[#allocation2 + $0x688] sm:$0xff]
    %v263 = vld [vmem:[#allocation2 + $0x690] sm:$0xff]
    %v264 = vld [vmem:[#allocation2 + $0x698] sm:$0xff]
    %v265 = vld [vmem:[#allocation2 + $0x6a0] sm:$0xff]
    %v266 = vld [vmem:[#allocation2 + $0x6a8] sm:$0xff]
    %v267 = vld [vmem:[#allocation2 + $0x6b0] sm:$0xff]
    %v268 = vld [vmem:[#allocation2 + $0x6b8] sm:$0xff]
    %v269 = vld [vmem:[#allocation2 + $0x6c0] sm:$0xff]
    %v270 = vld [vmem:[#allocation2 + $0x6c8] sm:$0xff]
    %v271 = vld [vmem:[#allocation2 + $0x6d0] sm:$0xff]
    %v272 = vld [vmem:[#allocation2 + $0x6d8] sm:$0xff]
    %v273 = vld [vmem:[#allocation2 + $0x6e0] sm:$0xff]
    %v274 = vld [vmem:[#allocation2 + $0x6e8] sm:$0xff]
    %v275 = vld [vmem:[#allocation2 + $0x6f0] sm:$0xff]
    %v276 = vld [vmem:[#allocation2 + $0x6f8] sm:$0xff]
    %v277 = vld [vmem:[#allocation2 + $0x700] sm:$0xff]
    %v278 = vld [vmem:[#allocation2 + $0x708] sm:$0xff]
    %v279 = vld [vmem:[#allocation2 + $0x710] sm:$0xff]
    %v280 = vld [vmem:[#allocation2 + $0x718] sm:$0xff]
    %v281 = vld [vmem:[#allocation2 + $0x720] sm:$0xff]
    %v282 = vld [vmem:[#allocation2 + $0x728] sm:$0xff]
    %v283 = vld [vmem:[#allocation2 + $0x730] sm:$0xff]
    %v284 = vld [vmem:[#allocation2 + $0x738] sm:$0xff]
    %v285 = vld [vmem:[#allocation2 + $0x740] sm:$0xff]
    %v286 = vld [vmem:[#allocation2 + $0x748] sm:$0xff]
    %v287 = vld [vmem:[#allocation2 + $0x750] sm:$0xff]
    %v288 = vld [vmem:[#allocation2 + $0x758] sm:$0xff]
    %v289 = vld [vmem:[#allocation2 + $0x760] sm:$0xff]
    %v290 = vld [vmem:[#allocation2 + $0x768] sm:$0xff]
    %v291 = vld [vmem:[#allocation2 + $0x770] sm:$0xff]
    %v292 = vld [vmem:[#allocation2 + $0x778] sm:$0xff]
    %v293 = vld [vmem:[#allocation2 + $0x780] sm:$0xff]
    %v294 = vld [vmem:[#allocation2 + $0x788] sm:$0xff]
    %v295 = vld [vmem:[#allocation2 + $0x790] sm:$0xff]
    %v296 = vld [vmem:[#allocation2 + $0x798] sm:$0xff]
    %v297 = vld [vmem:[#allocation2 + $0x7a0] sm:$0xff]
    %v298 = vld [vmem:[#allocation2 + $0x7a8] sm:$0xff]
    %v299 = vld [vmem:[#allocation2 + $0x7b0] sm:$0xff]
    %v300 = vld [vmem:[#allocation2 + $0x7b8] sm:$0xff]
    %v301 = vld [vmem:[#allocation2 + $0x7c0] sm:$0xff]
    %v302 = vld [vmem:[#allocation2 + $0x7c8] sm:$0xff]
    %v303 = vld [vmem:[#allocation2 + $0x7d0] sm:$0xff]
    %v304 = vld [vmem:[#allocation2 + $0x7d8] sm:$0xff]
    %v305 = vld [vmem:[#allocation2 + $0x7e0] sm:$0xff]
    %v306 = vld [vmem:[#allocation2 + $0x7e8] sm:$0xff]
    %v307 = vld [vmem:[#allocation2 + $0x7f0] sm:$0xff]
    %v308 = vld [vmem:[#allocation2 + $0x7f8] sm:$0xff]
    %v309 = vld [vmem:[#allocation2 + $0x800] sm:$0xff]
    %v310 = vld [vmem:[#allocation2 + $0x808] sm:$0xff]
    %v311 = vld [vmem:[#allocation2 + $0x810] sm:$0xff]
    %v312 = vld [vmem:[#allocation2 + $0x818] sm:$0xff]
    %v313 = vld [vmem:[#allocation2 + $0x820] sm:$0xff]
    %v314 = vld [vmem:[#allocation2 + $0x828] sm:$0xff]
    %v315 = vld [vmem:[#allocation2 + $0x830] sm:$0xff]
    %v316 = vld [vmem:[#allocation2 + $0x838] sm:$0xff]
    %v317 = vld [vmem:[#allocation2 + $0x840] sm:$0xff]
    %v318 = vld [vmem:[#allocation2 + $0x848] sm:$0xff]
    %v319 = vld [vmem:[#allocation2 + $0x850] sm:$0xff]
    %v320 = vld [vmem:[#allocation2 + $0x858] sm:$0xff]
    %v321 = vld [vmem:[#allocation2 + $0x860] sm:$0xff]
    %v322 = vld [vmem:[#allocation2 + $0x868] sm:$0xff]
    %v323 = vld [vmem:[#allocation2 + $0x870] sm:$0xff]
    %v324 = vld [vmem:[#allocation2 + $0x878] sm:$0xff]
    %v325 = vld [vmem:[#allocation2 + $0x880] sm:$0xff]
    %v326 = vld [vmem:[#allocation2 + $0x888] sm:$0xff]
    %v327 = vld [vmem:[#allocation2 + $0x890] sm:$0xff]
    %v328 = vld [vmem:[#allocation2 + $0x898] sm:$0xff]
    %v329 = vld [vmem:[#allocation2 + $0x8a0] sm:$0xff]
    %v330 = vld [vmem:[#allocation2 + $0x8a8] sm:$0xff]
    %v331 = vld [vmem:[#allocation2 + $0x8b0] sm:$0xff]
    %v332 = vld [vmem:[#allocation2 + $0x8b8] sm:$0xff]
    %v333 = vld [vmem:[#allocation2 + $0x8c0] sm:$0xff]
    %v334 = vld [vmem:[#allocation2 + $0x8c8] sm:$0xff]
    %v335 = vld [vmem:[#allocation2 + $0x8d0] sm:$0xff]
    %v336 = vld [vmem:[#allocation2 + $0x8d8] sm:$0xff]
    %v337 = vld [vmem:[#allocation2 + $0x8e0] sm:$0xff]
    %v338 = vld [vmem:[#allocation2 + $0x8e8] sm:$0xff]
    %v339 = vld [vmem:[#allocation2 + $0x8f0] sm:$0xff]
    %v340 = vld [vmem:[#allocation2 + $0x8f8] sm:$0xff]
    %v341 = vld [vmem:[#allocation2 + $0x900] sm:$0xff]
    %v342 = vld [vmem:[#allocation2 + $0x908] sm:$0xff]
    %v343 = vld [vmem:[#allocation2 + $0x910] sm:$0xff]
    %v344 = vld [vmem:[#allocation2 + $0x918] sm:$0xff]
    %v345 = vld [vmem:[#allocation2 + $0x920] sm:$0xff]
    %v346 = vld [vmem:[#allocation2 + $0x928] sm:$0xff]
    %v347 = vld [vmem:[#allocation2 + $0x930] sm:$0xff]
    %v348 = vld [vmem:[#allocation2 + $0x938] sm:$0xff]
    %v349 = vld [vmem:[#allocation2 + $0x940] sm:$0xff]
    %v350 = vld [vmem:[#allocation2 + $0x948] sm:$0xff]
    %v351 = vld [vmem:[#allocation2 + $0x950] sm:$0xff]
    %v352 = vld [vmem:[#allocation2 + $0x958] sm:$0xff]
    %v353 = vld [vmem:[#allocation2 + $0x960] sm:$0xff]
    %v354 = vld [vmem:[#allocation2 + $0x968] sm:$0xff]
    %v355 = vld [vmem:[#allocation2 + $0x970] sm:$0xff]
    %v356 = vld [vmem:[#allocation2 + $0x978] sm:$0xff]
    %v357 = vld [vmem:[#allocation2 + $0x980] sm:$0xff]
    %v358 = vld [vmem:[#allocation2 + $0x988] sm:$0xff]
    %v359 = vld [vmem:[#allocation2 + $0x990] sm:$0xff]
    %v360 = vld [vmem:[#allocation2 + $0x998] sm:$0xff]
    %v361 = vld [vmem:[#allocation2 + $0x9a0] sm:$0xff]
    %v362 = vld [vmem:[#allocation2 + $0x9a8] sm:$0xff]
    %v363 = vld [vmem:[#allocation2 + $0x9b0] sm:$0xff]
    %v364 = vld [vmem:[#allocation2 + $0x9b8] sm:$0xff]
    %v365 = vld [vmem:[#allocation2 + $0x9c0] sm:$0xff]
    %v366 = vld [vmem:[#allocation2 + $0x9c8] sm:$0xff]
    %v367 = vld [vmem:[#allocation2 + $0x9d0] sm:$0xff]
    %v368 = vld [vmem:[#allocation2 + $0x9d8] sm:$0xff]
    %v369 = vld [vmem:[#allocation2 + $0x9e0] sm:$0xff]
    %v370 = vld [vmem:[#allocation2 + $0x9e8] sm:$0xff]
    %v371 = vld [vmem:[#allocation2 + $0x9f0] sm:$0xff]
    %v372 = vld [vmem:[#allocation2 + $0x9f8] sm:$0xff]
    %v373 = vld [vmem:[#allocation2 + $0xa00] sm:$0xff]
    %v374 = vld [vmem:[#allocation2 + $0xa08] sm:$0xff]
    %v375 = vld [vmem:[#allocation2 + $0xa10] sm:$0xff]
    %v376 = vld [vmem:[#allocation2 + $0xa18] sm:$0xff]
    %v377 = vld [vmem:[#allocation2 + $0xa20] sm:$0xff]
    %v378 = vld [vmem:[#allocation2 + $0xa28] sm:$0xff]
    %v379 = vld [vmem:[#allocation2 + $0xa30] sm:$0xff]
    %v380 = vld [vmem:[#allocation2 + $0xa38] sm:$0xff]
    %v381 = vld [vmem:[#allocation2 + $0xa40] sm:$0xff]
    %v382 = vld [vmem:[#allocation2 + $0xa48] sm:$0xff]
    %v383 = vld [vmem:[#allocation2 + $0xa50] sm:$0xff]
    %v384 = vld [vmem:[#allocation2 + $0xa58] sm:$0xff]
    %v385 = vld [vmem:[#allocation2 + $0xa60] sm:$0xff]
    %v386 = vld [vmem:[#allocation2 + $0xa68] sm:$0xff]
    %v387 = vld [vmem:[#allocation2 + $0xa70] sm:$0xff]
    %v388 = vld [vmem:[#allocation2 + $0xa78] sm:$0xff]
    %v389 = vld [vmem:[#allocation2 + $0xa80] sm:$0xff]
    %v390 = vld [vmem:[#allocation2 + $0xa88] sm:$0xff]
    %v391 = vld [vmem:[#allocation2 + $0xa90] sm:$0xff]
    %v392 = vld [vmem:[#allocation2 + $0xa98] sm:$0xff]
    %v393 = vld [vmem:[#allocation2 + $0xaa0] sm:$0xff]
    %v394 = vld [vmem:[#allocation2 + $0xaa8] sm:$0xff]
    %v395 = vld [vmem:[#allocation2 + $0xab0] sm:$0xff]
    %v396 = vld [vmem:[#allocation2 + $0xab8] sm:$0xff]
    %v397 = vld [vmem:[#allocation2 + $0xac0] sm:$0xff]
    %v398 = vld [vmem:[#allocation2 + $0xac8] sm:$0xff]
    %v399 = vld [vmem:[#allocation2 + $0xad0] sm:$0xff]
    %v400 = vld [vmem:[#allocation2 + $0xad8] sm:$0xff]
    %v401 = vld [vmem:[#allocation2 + $0xae0] sm:$0xff]
    %v402 = vld [vmem:[#allocation2 + $0xae8] sm:$0xff]
    %v403 = vld [vmem:[#allocation2 + $0xaf0] sm:$0xff]
    %v404 = vld [vmem:[#allocation2 + $0xaf8] sm:$0xff]
    %v405 = vld [vmem:[#allocation2 + $0xb00] sm:$0xff]
    %v406 = vld [vmem:[#allocation2 + $0xb08] sm:$0xff]
    %v407 = vld [vmem:[#allocation2 + $0xb10] sm:$0xff]
    %v408 = vld [vmem:[#allocation2 + $0xb18] sm:$0xff]
    %v409 = vld [vmem:[#allocation2 + $0xb20] sm:$0xff]
    %v410 = vld [vmem:[#allocation2 + $0xb28] sm:$0xff]
    %v411 = vld [vmem:[#allocation2 + $0xb30] sm:$0xff]
    %v412 = vld [vmem:[#allocation2 + $0xb38] sm:$0xff]
    %v413 = vld [vmem:[#allocation2 + $0xb40] sm:$0xff]
    %v414 = vld [vmem:[#allocation2 + $0xb48] sm:$0xff]
    %v415 = vld [vmem:[#allocation2 + $0xb50] sm:$0xff]
    %v416 = vld [vmem:[#allocation2 + $0xb58] sm:$0xff]
    %v417 = vld [vmem:[#allocation2 + $0xb60] sm:$0xff]
    %v418 = vld [vmem:[#allocation2 + $0xb68] sm:$0xff]
    %v419 = vld [vmem:[#allocation2 + $0xb70] sm:$0xff]
    %v420 = vld [vmem:[#allocation2 + $0xb78] sm:$0xff]
    %v421 = vld [vmem:[#allocation2 + $0xb80] sm:$0xff]
    %v422 = vld [vmem:[#allocation2 + $0xb88] sm:$0xff]
    %v423 = vld [vmem:[#allocation2 + $0xb90] sm:$0xff]
    %v424 = vld [vmem:[#allocation2 + $0xb98] sm:$0xff]
    %v425 = vld [vmem:[#allocation2 + $0xba0] sm:$0xff]
    %v426 = vld [vmem:[#allocation2 + $0xba8] sm:$0xff]
    %v427 = vld [vmem:[#allocation2 + $0xbb0] sm:$0xff]
    %v428 = vld [vmem:[#allocation2 + $0xbb8] sm:$0xff]
    %v429 = vld [vmem:[#allocation2 + $0xbc0] sm:$0xff]
    %v430 = vld [vmem:[#allocation2 + $0xbc8] sm:$0xff]
    %v431 = vld [vmem:[#allocation2 + $0xbd0] sm:$0xff]
    %v432 = vld [vmem:[#allocation2 + $0xbd8] sm:$0xff]
    %v433 = vld [vmem:[#allocation2 + $0xbe0] sm:$0xff]
    %v434 = vld [vmem:[#allocation2 + $0xbe8] sm:$0xff]
    %v435 = vld [vmem:[#allocation2 + $0xbf0] sm:$0xff]
    %v436 = vld [vmem:[#allocation2 + $0xbf8] sm:$0xff]
    %v437 = vld [vmem:[#allocation2 + $0xc00] sm:$0xff]
    %v438 = vld [vmem:[#allocation2 + $0xc08] sm:$0xff]
    %v439 = vld [vmem:[#allocation2 + $0xc10] sm:$0xff]
    %v440 = vld [vmem:[#allocation2 + $0xc18] sm:$0xff]
    %v441 = vld [vmem:[#allocation2 + $0xc20] sm:$0xff]
    %v442 = vld [vmem:[#allocation2 + $0xc28] sm:$0xff]
    %v443 = vld [vmem:[#allocation2 + $0xc30] sm:$0xff]
    %v444 = vld [vmem:[#allocation2 + $0xc38] sm:$0xff]
    %v445 = vld [vmem:[#allocation2 + $0xc40] sm:$0xff]
    %v446 = vld [vmem:[#allocation2 + $0xc48] sm:$0xff]
    %v447 = vld [vmem:[#allocation2 + $0xc50] sm:$0xff]
    %v448 = vld [vmem:[#allocation2 + $0xc58] sm:$0xff]
    %v449 = vld [vmem:[#allocation2 + $0xc60] sm:$0xff]
    %v450 = vld [vmem:[#allocation2 + $0xc68] sm:$0xff]
    %v451 = vld [vmem:[#allocation2 + $0xc70] sm:$0xff]
    %v452 = vld [vmem:[#allocation2 + $0xc78] sm:$0xff]
    %v453 = vld [vmem:[#allocation2 + $0xc80] sm:$0xff]
    %v454 = vld [vmem:[#allocation2 + $0xc88] sm:$0xff]
    %v455 = vld [vmem:[#allocation2 + $0xc90] sm:$0xff]
    %v456 = vld [vmem:[#allocation2 + $0xc98] sm:$0xff]
    %v457 = vld [vmem:[#allocation2 + $0xca0] sm:$0xff]
    %v458 = vld [vmem:[#allocation2 + $0xca8] sm:$0xff]
    %v459 = vld [vmem:[#allocation2 + $0xcb0] sm:$0xff]
    %v460 = vld [vmem:[#allocation2 + $0xcb8] sm:$0xff]
    %v461 = vld [vmem:[#allocation2 + $0xcc0] sm:$0xff]
    %v462 = vld [vmem:[#allocation2 + $0xcc8] sm:$0xff]
    %v463 = vld [vmem:[#allocation2 + $0xcd0] sm:$0xff]
    %v464 = vld [vmem:[#allocation2 + $0xcd8] sm:$0xff]
    %v465 = vld [vmem:[#allocation2 + $0xce0] sm:$0xff]
    %v466 = vld [vmem:[#allocation2 + $0xce8] sm:$0xff]
    %v467 = vld [vmem:[#allocation2 + $0xcf0] sm:$0xff]
    %v468 = vld [vmem:[#allocation2 + $0xcf8] sm:$0xff]
    %v469 = vld [vmem:[#allocation2 + $0xd00] sm:$0xff]
    %v470 = vld [vmem:[#allocation2 + $0xd08] sm:$0xff]
    %v471 = vld [vmem:[#allocation2 + $0xd10] sm:$0xff]
    %v472 = vld [vmem:[#allocation2 + $0xd18] sm:$0xff]
    %v473 = vld [vmem:[#allocation2 + $0xd20] sm:$0xff]
    %v474 = vld [vmem:[#allocation2 + $0xd28] sm:$0xff]
    %v475 = vld [vmem:[#allocation2 + $0xd30] sm:$0xff]
    %v476 = vld [vmem:[#allocation2 + $0xd38] sm:$0xff]
    %v477 = vld [vmem:[#allocation2 + $0xd40] sm:$0xff]
    %v478 = vld [vmem:[#allocation2 + $0xd48] sm:$0xff]
    %v479 = vld [vmem:[#allocation2 + $0xd50] sm:$0xff]
    %v480 = vld [vmem:[#allocation2 + $0xd58] sm:$0xff]
    %v481 = vld [vmem:[#allocation2 + $0xd60] sm:$0xff]
    %v482 = vld [vmem:[#allocation2 + $0xd68] sm:$0xff]
    %v483 = vld [vmem:[#allocation2 + $0xd70] sm:$0xff]
    %v484 = vld [vmem:[#allocation2 + $0xd78] sm:$0xff]
    %v485 = vld [vmem:[#allocation2 + $0xd80] sm:$0xff]
    %v486 = vld [vmem:[#allocation2 + $0xd88] sm:$0xff]
    %v487 = vld [vmem:[#allocation2 + $0xd90] sm:$0xff]
    %v488 = vld [vmem:[#allocation2 + $0xd98] sm:$0xff]
    %v489 = vld [vmem:[#allocation2 + $0xda0] sm:$0xff]
    %v490 = vld [vmem:[#allocation2 + $0xda8] sm:$0xff]
    %v491 = vld [vmem:[#allocation2 + $0xdb0] sm:$0xff]
    %v492 = vld [vmem:[#allocation2 + $0xdb8] sm:$0xff]
    %v493 = vld [vmem:[#allocation2 + $0xdc0] sm:$0xff]
    %v494 = vld [vmem:[#allocation2 + $0xdc8] sm:$0xff]
    %v495 = vld [vmem:[#allocation2 + $0xdd0] sm:$0xff]
    %v496 = vld [vmem:[#allocation2 + $0xdd8] sm:$0xff]
    %v497 = vld [vmem:[#allocation2 + $0xde0] sm:$0xff]
    %v498 = vld [vmem:[#allocation2 + $0xde8] sm:$0xff]
    %v499 = vld [vmem:[#allocation2 + $0xdf0] sm:$0xff]
    %v500 = vld [vmem:[#allocation2 + $0xdf8] sm:$0xff]
    %v501 = vld [vmem:[#allocation2 + $0xe00] sm:$0xff]
    %v502 = vld [vmem:[#allocation2 + $0xe08] sm:$0xff]
    %v503 = vld [vmem:[#allocation2 + $0xe10] sm:$0xff]
    %v504 = vld [vmem:[#allocation2 + $0xe18] sm:$0xff]
    %v505 = vld [vmem:[#allocation2 + $0xe20] sm:$0xff]
    %v506 = vld [vmem:[#allocation2 + $0xe28] sm:$0xff]
    %v507 = vld [vmem:[#allocation2 + $0xe30] sm:$0xff]
    %v508 = vld [vmem:[#allocation2 + $0xe38] sm:$0xff]
    %v509 = vld [vmem:[#allocation2 + $0xe40] sm:$0xff]
    %v510 = vld [vmem:[#allocation2 + $0xe48] sm:$0xff]
    %v511 = vld [vmem:[#allocation2 + $0xe50] sm:$0xff]
    %v512 = vld [vmem:[#allocation2 + $0xe58] sm:$0xff]
    %v513 = vld [vmem:[#allocation2 + $0xe60] sm:$0xff]
    %v514 = vld [vmem:[#allocation2 + $0xe68] sm:$0xff]
    %v515 = vld [vmem:[#allocation2 + $0xe70] sm:$0xff]
    %v516 = vld [vmem:[#allocation2 + $0xe78] sm:$0xff]
    %v517 = vld [vmem:[#allocation2 + $0xe80] sm:$0xff]
    %v518 = vld [vmem:[#allocation2 + $0xe88] sm:$0xff]
    %v519 = vld [vmem:[#allocation2 + $0xe90] sm:$0xff]
    %v520 = vld [vmem:[#allocation2 + $0xe98] sm:$0xff]
    %v521 = vld [vmem:[#allocation2 + $0xea0] sm:$0xff]
    %v522 = vld [vmem:[#allocation2 + $0xea8] sm:$0xff]
    %v523 = vld [vmem:[#allocation2 + $0xeb0] sm:$0xff]
    %v524 = vld [vmem:[#allocation2 + $0xeb8] sm:$0xff]
    %v525 = vld [vmem:[#allocation2 + $0xec0] sm:$0xff]
    %v526 = vld [vmem:[#allocation2 + $0xec8] sm:$0xff]
    %v527 = vld [vmem:[#allocation2 + $0xed0] sm:$0xff]
    %v528 = vld [vmem:[#allocation2 + $0xed8] sm:$0xff]
    %v529 = vld [vmem:[#allocation2 + $0xee0] sm:$0xff]
    %v530 = vld [vmem:[#allocation2 + $0xee8] sm:$0xff]
    %v531 = vld [vmem:[#allocation2 + $0xef0] sm:$0xff]
    %v532 = vld [vmem:[#allocation2 + $0xef8] sm:$0xff]
    %v533 = vld [vmem:[#allocation2 + $0xf00] sm:$0xff]
    %v534 = vld [vmem:[#allocation2 + $0xf08] sm:$0xff]
    %v535 = vld [vmem:[#allocation2 + $0xf10] sm:$0xff]
    %v536 = vld [vmem:[#allocation2 + $0xf18] sm:$0xff]
    %v537 = vld [vmem:[#allocation2 + $0xf20] sm:$0xff]
    %v538 = vld [vmem:[#allocation2 + $0xf28] sm:$0xff]
    %v539 = vld [vmem:[#allocation2 + $0xf30] sm:$0xff]
    %v540 = vld [vmem:[#allocation2 + $0xf38] sm:$0xff]
    %v541 = vld [vmem:[#allocation2 + $0xf40] sm:$0xff]
    %v542 = vld [vmem:[#allocation2 + $0xf48] sm:$0xff]
    %v543 = vld [vmem:[#allocation2 + $0xf50] sm:$0xff]
    %v544 = vld [vmem:[#allocation2 + $0xf58] sm:$0xff]
    %v545 = vld [vmem:[#allocation2 + $0xf60] sm:$0xff]
    %v546 = vld [vmem:[#allocation2 + $0xf68] sm:$0xff]
    %v547 = vld [vmem:[#allocation2 + $0xf70] sm:$0xff]
    %v548 = vld [vmem:[#allocation2 + $0xf78] sm:$0xff]
    %v549 = vld [vmem:[#allocation2 + $0xf80] sm:$0xff]
    %v550 = vld [vmem:[#allocation2 + $0xf88] sm:$0xff]
    %v551 = vld [vmem:[#allocation2 + $0xf90] sm:$0xff]
    %v552 = vld [vmem:[#allocation2 + $0xf98] sm:$0xff]
    %v553 = vld [vmem:[#allocation2 + $0xfa0] sm:$0xff]
    %v554 = vld [vmem:[#allocation2 + $0xfa8] sm:$0xff]
    %v555 = vld [vmem:[#allocation2 + $0xfb0] sm:$0xff]
    %v556 = vld [vmem:[#allocation2 + $0xfb8] sm:$0xff]
    %v557 = vld [vmem:[#allocation2 + $0xfc0] sm:$0xff]
    %v558 = vld [vmem:[#allocation2 + $0xfc8] sm:$0xff]
    %v559 = vld [vmem:[#allocation2 + $0xfd0] sm:$0xff]
    %v560 = vld [vmem:[#allocation2 + $0xfd8] sm:$0xff]
    %v561 = vld [vmem:[#allocation2 + $0xfe0] sm:$0xff]
    %v562 = vld [vmem:[#allocation2 + $0xfe8] sm:$0xff]
    %v563 = vld [vmem:[#allocation2 + $0xff0] sm:$0xff]
    %v564 = vld [vmem:[#allocation2 + $0xff8] sm:$0xff]
    %v565 = vld [vmem:[%s1] sm:$0xff]
    %v566 = vld [vmem:[%s1 + $0x8] sm:$0xff]
    %v567 = vld [vmem:[%s1 + $0x10] sm:$0xff]
    %v568 = vld [vmem:[%s1 + $0x18] sm:$0xff]
    %v569 = vld [vmem:[#allocation4] sm:$0xff]
    %v570 = vld [vmem:[#allocation4 + $0x8] sm:$0xff]
    %v571 = vld [vmem:[#allocation4 + $0x10] sm:$0xff]
    %v572 = vld [vmem:[#allocation4 + $0x18] sm:$0xff]
    %v573 = vld [vmem:[#allocation4 + $0x20] sm:$0xff]
    %v574 = vld [vmem:[#allocation4 + $0x28] sm:$0xff]
    %v575 = vld [vmem:[#allocation4 + $0x30] sm:$0xff]
    %v576 = vld [vmem:[#allocation4 + $0x38] sm:$0xff]
    %v577 = vld [vmem:[#allocation4 + $0x40] sm:$0xff]
    %v578 = vld [vmem:[#allocation4 + $0x48] sm:$0xff]
    %v579 = vld [vmem:[#allocation4 + $0x50] sm:$0xff]
    %v580 = vld [vmem:[#allocation4 + $0x58] sm:$0xff]
    %v581 = vld [vmem:[#allocation4 + $0x60] sm:$0xff]
    %v582 = vld [vmem:[#allocation4 + $0x68] sm:$0xff]
    %v583 = vld [vmem:[#allocation4 + $0x70] sm:$0xff]
    %v584 = vld [vmem:[#allocation4 + $0x78] sm:$0xff]
    %v585 = vld [vmem:[#allocation4 + $0x80] sm:$0xff]
    %v586 = vld [vmem:[#allocation4 + $0x88] sm:$0xff]
    %v587 = vld [vmem:[#allocation4 + $0x90] sm:$0xff]
    %v588 = vld [vmem:[#allocation4 + $0x98] sm:$0xff]
    %v589 = vld [vmem:[#allocation4 + $0xa0] sm:$0xff]
    %v590 = vld [vmem:[#allocation4 + $0xa8] sm:$0xff]
    %v591 = vld [vmem:[#allocation4 + $0xb0] sm:$0xff]
    %v592 = vld [vmem:[#allocation4 + $0xb8] sm:$0xff]
    %v593 = vld [vmem:[#allocation4 + $0xc0] sm:$0xff]
    %v594 = vld [vmem:[#allocation4 + $0xc8] sm:$0xff]
    %v595 = vld [vmem:[#allocation4 + $0xd0] sm:$0xff]
    %v596 = vld [vmem:[#allocation4 + $0xd8] sm:$0xff]
    %v597 = vld [vmem:[#allocation4 + $0xe0] sm:$0xff]
    %v598 = vld [vmem:[#allocation4 + $0xe8] sm:$0xff]
    %v599 = vld [vmem:[#allocation4 + $0xf0] sm:$0xff]
    %v600 = vld [vmem:[#allocation4 + $0xf8] sm:$0xff]
    %v601 = vld [vmem:[#allocation4 + $0x100] sm:$0xff]
    %v602 = vld [vmem:[#allocation4 + $0x108] sm:$0xff]
    %v603 = vld [vmem:[#allocation4 + $0x110] sm:$0xff]
    %v604 = vld [vmem:[#allocation4 + $0x118] sm:$0xff]
    %v605 = vld [vmem:[#allocation4 + $0x120] sm:$0xff]
    %v606 = vld [vmem:[#allocation4 + $0x128] sm:$0xff]
    %v607 = vld [vmem:[#allocation4 + $0x130] sm:$0xff]
    %v608 = vld [vmem:[#allocation4 + $0x138] sm:$0xff]
    %v609 = vld [vmem:[#allocation4 + $0x140] sm:$0xff]
    %v610 = vld [vmem:[#allocation4 + $0x148] sm:$0xff]
    %v611 = vld [vmem:[#allocation4 + $0x150] sm:$0xff]
    %v612 = vld [vmem:[#allocation4 + $0x158] sm:$0xff]
    %v613 = vld [vmem:[#allocation4 + $0x160] sm:$0xff]
    %v614 = vld [vmem:[#allocation4 + $0x168] sm:$0xff]
    %v615 = vld [vmem:[#allocation4 + $0x170] sm:$0xff]
    %v616 = vld [vmem:[#allocation4 + $0x178] sm:$0xff]
    %v617 = vld [vmem:[#allocation4 + $0x180] sm:$0xff]
    %v618 = vld [vmem:[#allocation4 + $0x188] sm:$0xff]
    %v619 = vld [vmem:[#allocation4 + $0x190] sm:$0xff]
    %v620 = vld [vmem:[#allocation4 + $0x198] sm:$0xff]
    %v621 = vld [vmem:[#allocation4 + $0x1a0] sm:$0xff]
    %v622 = vld [vmem:[#allocation4 + $0x1a8] sm:$0xff]
    %v623 = vld [vmem:[#allocation4 + $0x1b0] sm:$0xff]
    %v624 = vld [vmem:[#allocation4 + $0x1b8] sm:$0xff]
    %v625 = vld [vmem:[#allocation4 + $0x1c0] sm:$0xff]
    %v626 = vld [vmem:[#allocation4 + $0x1c8] sm:$0xff]
    %v627 = vld [vmem:[#allocation4 + $0x1d0] sm:$0xff]
    %v628 = vld [vmem:[#allocation4 + $0x1d8] sm:$0xff]
    %v629 = vld [vmem:[#allocation4 + $0x1e0] sm:$0xff]
    %v630 = vld [vmem:[#allocation4 + $0x1e8] sm:$0xff]
    %v631 = vld [vmem:[#allocation4 + $0x1f0] sm:$0xff]
    %v632 = vld [vmem:[#allocation4 + $0x1f8] sm:$0xff]
    %v633 = vld [vmem:[#allocation4 + $0x200] sm:$0xff]
    %v634 = vld [vmem:[#allocation4 + $0x208] sm:$0xff]
    %v635 = vld [vmem:[#allocation4 + $0x210] sm:$0xff]
    %v636 = vld [vmem:[#allocation4 + $0x218] sm:$0xff]
    %v637 = vld [vmem:[#allocation4 + $0x220] sm:$0xff]
    %v638 = vld [vmem:[#allocation4 + $0x228] sm:$0xff]
    %v639 = vld [vmem:[#allocation4 + $0x230] sm:$0xff]
    %v640 = vld [vmem:[#allocation4 + $0x238] sm:$0xff]
    %v641 = vld [vmem:[#allocation4 + $0x240] sm:$0xff]
    %v642 = vld [vmem:[#allocation4 + $0x248] sm:$0xff]
    %v643 = vld [vmem:[#allocation4 + $0x250] sm:$0xff]
    %v644 = vld [vmem:[#allocation4 + $0x258] sm:$0xff]
    %v645 = vld [vmem:[#allocation4 + $0x260] sm:$0xff]
    %v646 = vld [vmem:[#allocation4 + $0x268] sm:$0xff]
    %v647 = vld [vmem:[#allocation4 + $0x270] sm:$0xff]
    %v648 = vld [vmem:[#allocation4 + $0x278] sm:$0xff]
    %v649 = vld [vmem:[#allocation4 + $0x280] sm:$0xff]
    %v650 = vld [vmem:[#allocation4 + $0x288] sm:$0xff]
    %v651 = vld [vmem:[#allocation4 + $0x290] sm:$0xff]
    %v652 = vld [vmem:[#allocation4 + $0x298] sm:$0xff]
    %v653 = vld [vmem:[#allocation4 + $0x2a0] sm:$0xff]
    %v654 = vld [vmem:[#allocation4 + $0x2a8] sm:$0xff]
    %v655 = vld [vmem:[#allocation4 + $0x2b0] sm:$0xff]
    %v656 = vld [vmem:[#allocation4 + $0x2b8] sm:$0xff]
    %v657 = vld [vmem:[#allocation4 + $0x2c0] sm:$0xff]
    %v658 = vld [vmem:[#allocation4 + $0x2c8] sm:$0xff]
    %v659 = vld [vmem:[#allocation4 + $0x2d0] sm:$0xff]
    %v660 = vld [vmem:[#allocation4 + $0x2d8] sm:$0xff]
    %v661 = vld [vmem:[#allocation4 + $0x2e0] sm:$0xff]
    %v662 = vld [vmem:[#allocation4 + $0x2e8] sm:$0xff]
    %v663 = vld [vmem:[#allocation4 + $0x2f0] sm:$0xff]
    %v664 = vld [vmem:[#allocation4 + $0x2f8] sm:$0xff]
    %v665 = vld [vmem:[#allocation4 + $0x300] sm:$0xff]
    %v666 = vld [vmem:[#allocation4 + $0x308] sm:$0xff]
    %v667 = vld [vmem:[#allocation4 + $0x310] sm:$0xff]
    %v668 = vld [vmem:[#allocation4 + $0x318] sm:$0xff]
    %v669 = vld [vmem:[#allocation4 + $0x320] sm:$0xff]
    %v670 = vld [vmem:[#allocation4 + $0x328] sm:$0xff]
    %v671 = vld [vmem:[#allocation4 + $0x330] sm:$0xff]
    %v672 = vld [vmem:[#allocation4 + $0x338] sm:$0xff]
    %v673 = vld [vmem:[#allocation4 + $0x340] sm:$0xff]
    %v674 = vld [vmem:[#allocation4 + $0x348] sm:$0xff]
    %v675 = vld [vmem:[#allocation4 + $0x350] sm:$0xff]
    %v676 = vld [vmem:[#allocation4 + $0x358] sm:$0xff]
    %v677 = vld [vmem:[#allocation4 + $0x360] sm:$0xff]
    %v678 = vld [vmem:[#allocation4 + $0x368] sm:$0xff]
    %v679 = vld [vmem:[#allocation4 + $0x370] sm:$0xff]
    %v680 = vld [vmem:[#allocation4 + $0x378] sm:$0xff]
    %v681 = vld [vmem:[#allocation4 + $0x380] sm:$0xff]
    %v682 = vld [vmem:[#allocation4 + $0x388] sm:$0xff]
    %v683 = vld [vmem:[#allocation4 + $0x390] sm:$0xff]
    %v684 = vld [vmem:[#allocation4 + $0x398] sm:$0xff]
    %v685 = vld [vmem:[#allocation4 + $0x3a0] sm:$0xff]
    %v686 = vld [vmem:[#allocation4 + $0x3a8] sm:$0xff]
    %v687 = vld [vmem:[#allocation4 + $0x3b0] sm:$0xff]
    %v688 = vld [vmem:[#allocation4 + $0x3b8] sm:$0xff]
    %v689 = vld [vmem:[#allocation4 + $0x3c0] sm:$0xff]
    %v690 = vld [vmem:[#allocation4 + $0x3c8] sm:$0xff]
    %v691 = vld [vmem:[#allocation4 + $0x3d0] sm:$0xff]
    %v692 = vld [vmem:[#allocation4 + $0x3d8] sm:$0xff]
    %v693 = vld [vmem:[#allocation4 + $0x3e0] sm:$0xff]
    %v694 = vld [vmem:[#allocation4 + $0x3e8] sm:$0xff]
    %v695 = vld [vmem:[#allocation4 + $0x3f0] sm:$0xff]
    %v696 = vld [vmem:[#allocation4 + $0x3f8] sm:$0xff]
    %v697 = vld [vmem:[#allocation4 + $0x400] sm:$0xff]
    %v698 = vld [vmem:[#allocation4 + $0x408] sm:$0xff]
    %v699 = vld [vmem:[#allocation4 + $0x410] sm:$0xff]
    %v700 = vld [vmem:[#allocation4 + $0x418] sm:$0xff]
    %v701 = vld [vmem:[#allocation4 + $0x420] sm:$0xff]
    %v702 = vld [vmem:[#allocation4 + $0x428] sm:$0xff]
    %v703 = vld [vmem:[#allocation4 + $0x430] sm:$0xff]
    %v704 = vld [vmem:[#allocation4 + $0x438] sm:$0xff]
    %v705 = vld [vmem:[#allocation4 + $0x440] sm:$0xff]
    %v706 = vld [vmem:[#allocation4 + $0x448] sm:$0xff]
    %v707 = vld [vmem:[#allocation4 + $0x450] sm:$0xff]
    %v708 = vld [vmem:[#allocation4 + $0x458] sm:$0xff]
    %v709 = vld [vmem:[#allocation4 + $0x460] sm:$0xff]
    %v710 = vld [vmem:[#allocation4 + $0x468] sm:$0xff]
    %v711 = vld [vmem:[#allocation4 + $0x470] sm:$0xff]
    %v712 = vld [vmem:[#allocation4 + $0x478] sm:$0xff]
    %v713 = vld [vmem:[#allocation4 + $0x480] sm:$0xff]
    %v714 = vld [vmem:[#allocation4 + $0x488] sm:$0xff]
    %v715 = vld [vmem:[#allocation4 + $0x490] sm:$0xff]
    %v716 = vld [vmem:[#allocation4 + $0x498] sm:$0xff]
    %v717 = vld [vmem:[#allocation4 + $0x4a0] sm:$0xff]
    %v718 = vld [vmem:[#allocation4 + $0x4a8] sm:$0xff]
    %v719 = vld [vmem:[#allocation4 + $0x4b0] sm:$0xff]
    %v720 = vld [vmem:[#allocation4 + $0x4b8] sm:$0xff]
    %v721 = vld [vmem:[#allocation4 + $0x4c0] sm:$0xff]
    %v722 = vld [vmem:[#allocation4 + $0x4c8] sm:$0xff]
    %v723 = vld [vmem:[#allocation4 + $0x4d0] sm:$0xff]
    %v724 = vld [vmem:[#allocation4 + $0x4d8] sm:$0xff]
    %v725 = vld [vmem:[#allocation4 + $0x4e0] sm:$0xff]
    %v726 = vld [vmem:[#allocation4 + $0x4e8] sm:$0xff]
    %v727 = vld [vmem:[#allocation4 + $0x4f0] sm:$0xff]
    %v728 = vld [vmem:[#allocation4 + $0x4f8] sm:$0xff]
    %v729 = vld [vmem:[#allocation4 + $0x500] sm:$0xff]
    %v730 = vld [vmem:[#allocation4 + $0x508] sm:$0xff]
    %v731 = vld [vmem:[#allocation4 + $0x510] sm:$0xff]
    %v732 = vld [vmem:[#allocation4 + $0x518] sm:$0xff]
    %v733 = vld [vmem:[#allocation4 + $0x520] sm:$0xff]
    %v734 = vld [vmem:[#allocation4 + $0x528] sm:$0xff]
    %v735 = vld [vmem:[#allocation4 + $0x530] sm:$0xff]
    %v736 = vld [vmem:[#allocation4 + $0x538] sm:$0xff]
    %v737 = vld [vmem:[#allocation4 + $0x540] sm:$0xff]
    %v738 = vld [vmem:[#allocation4 + $0x548] sm:$0xff]
    %v739 = vld [vmem:[#allocation4 + $0x550] sm:$0xff]
    %v740 = vld [vmem:[#allocation4 + $0x558] sm:$0xff]
    %v741 = vld [vmem:[#allocation4 + $0x560] sm:$0xff]
    %v742 = vld [vmem:[#allocation4 + $0x568] sm:$0xff]
    %v743 = vld [vmem:[#allocation4 + $0x570] sm:$0xff]
    %v744 = vld [vmem:[#allocation4 + $0x578] sm:$0xff]
    %v745 = vld [vmem:[#allocation4 + $0x580] sm:$0xff]
    %v746 = vld [vmem:[#allocation4 + $0x588] sm:$0xff]
    %v747 = vld [vmem:[#allocation4 + $0x590] sm:$0xff]
    %v748 = vld [vmem:[#allocation4 + $0x598] sm:$0xff]
    %v749 = vld [vmem:[#allocation4 + $0x5a0] sm:$0xff]
    %v750 = vld [vmem:[#allocation4 + $0x5a8] sm:$0xff]
    %v751 = vld [vmem:[#allocation4 + $0x5b0] sm:$0xff]
    %v752 = vld [vmem:[#allocation4 + $0x5b8] sm:$0xff]
    %v753 = vld [vmem:[#allocation4 + $0x5c0] sm:$0xff]
    %v754 = vld [vmem:[#allocation4 + $0x5c8] sm:$0xff]
    %v755 = vld [vmem:[#allocation4 + $0x5d0] sm:$0xff]
    %v756 = vld [vmem:[#allocation4 + $0x5d8] sm:$0xff]
    %v757 = vld [vmem:[#allocation4 + $0x5e0] sm:$0xff]
    %v758 = vld [vmem:[#allocation4 + $0x5e8] sm:$0xff]
    %v759 = vld [vmem:[#allocation4 + $0x5f0] sm:$0xff]
    %v760 = vld [vmem:[#allocation4 + $0x5f8] sm:$0xff]
    %v761 = vld [vmem:[#allocation4 + $0x600] sm:$0xff]
    %v762 = vld [vmem:[#allocation4 + $0x608] sm:$0xff]
    %v763 = vld [vmem:[#allocation4 + $0x610] sm:$0xff]
    %v764 = vld [vmem:[#allocation4 + $0x618] sm:$0xff]
    %v765 = vld [vmem:[#allocation4 + $0x620] sm:$0xff]
    %v766 = vld [vmem:[#allocation4 + $0x628] sm:$0xff]
    %v767 = vld [vmem:[#allocation4 + $0x630] sm:$0xff]
    %v768 = vld [vmem:[#allocation4 + $0x638] sm:$0xff]
    %v769 = vld [vmem:[#allocation4 + $0x640] sm:$0xff]
    %v770 = vld [vmem:[#allocation4 + $0x648] sm:$0xff]
    %v771 = vld [vmem:[#allocation4 + $0x650] sm:$0xff]
    %v772 = vld [vmem:[#allocation4 + $0x658] sm:$0xff]
    %v773 = vld [vmem:[#allocation4 + $0x660] sm:$0xff]
    %v774 = vld [vmem:[#allocation4 + $0x668] sm:$0xff]
    %v775 = vld [vmem:[#allocation4 + $0x670] sm:$0xff]
    %v776 = vld [vmem:[#allocation4 + $0x678] sm:$0xff]
    %v777 = vld [vmem:[#allocation4 + $0x680] sm:$0xff]
    %v778 = vld [vmem:[#allocation4 + $0x688] sm:$0xff]
    %v779 = vld [vmem:[#allocation4 + $0x690] sm:$0xff]
    %v780 = vld [vmem:[#allocation4 + $0x698] sm:$0xff]
    %v781 = vld [vmem:[#allocation4 + $0x6a0] sm:$0xff]
    %v782 = vld [vmem:[#allocation4 + $0x6a8] sm:$0xff]
    %v783 = vld [vmem:[#allocation4 + $0x6b0] sm:$0xff]
    %v784 = vld [vmem:[#allocation4 + $0x6b8] sm:$0xff]
    %v785 = vld [vmem:[#allocation4 + $0x6c0] sm:$0xff]
    %v786 = vld [vmem:[#allocation4 + $0x6c8] sm:$0xff]
    %v787 = vld [vmem:[#allocation4 + $0x6d0] sm:$0xff]
    %v788 = vld [vmem:[#allocation4 + $0x6d8] sm:$0xff]
    %v789 = vld [vmem:[#allocation4 + $0x6e0] sm:$0xff]
    %v790 = vld [vmem:[#allocation4 + $0x6e8] sm:$0xff]
    %v791 = vld [vmem:[#allocation4 + $0x6f0] sm:$0xff]
    %v792 = vld [vmem:[#allocation4 + $0x6f8] sm:$0xff]
    %v793 = vld [vmem:[#allocation4 + $0x700] sm:$0xff]
    %v794 = vld [vmem:[#allocation4 + $0x708] sm:$0xff]
    %v795 = vld [vmem:[#allocation4 + $0x710] sm:$0xff]
    %v796 = vld [vmem:[#allocation4 + $0x718] sm:$0xff]
    %v797 = vld [vmem:[#allocation4 + $0x720] sm:$0xff]
    %v798 = vld [vmem:[#allocation4 + $0x728] sm:$0xff]
    %v799 = vld [vmem:[#allocation4 + $0x730] sm:$0xff]
    %v800 = vld [vmem:[#allocation4 + $0x738] sm:$0xff]
    %v801 = vld [vmem:[#allocation4 + $0x740] sm:$0xff]
    %v802 = vld [vmem:[#allocation4 + $0x748] sm:$0xff]
    %v803 = vld [vmem:[#allocation4 + $0x750] sm:$0xff]
    %v804 = vld [vmem:[#allocation4 + $0x758] sm:$0xff]
    %v805 = vld [vmem:[#allocation4 + $0x760] sm:$0xff]
    %v806 = vld [vmem:[#allocation4 + $0x768] sm:$0xff]
    %v807 = vld [vmem:[#allocation4 + $0x770] sm:$0xff]
    %v808 = vld [vmem:[#allocation4 + $0x778] sm:$0xff]
    %v809 = vld [vmem:[#allocation4 + $0x780] sm:$0xff]
    %v810 = vld [vmem:[#allocation4 + $0x788] sm:$0xff]
    %v811 = vld [vmem:[#allocation4 + $0x790] sm:$0xff]
    %v812 = vld [vmem:[#allocation4 + $0x798] sm:$0xff]
    %v813 = vld [vmem:[#allocation4 + $0x7a0] sm:$0xff]
    %v814 = vld [vmem:[#allocation4 + $0x7a8] sm:$0xff]
    %v815 = vld [vmem:[#allocation4 + $0x7b0] sm:$0xff]
    %v816 = vld [vmem:[#allocation4 + $0x7b8] sm:$0xff]
    %v817 = vld [vmem:[#allocation4 + $0x7c0] sm:$0xff]
    %v818 = vld [vmem:[#allocation4 + $0x7c8] sm:$0xff]
    %v819 = vld [vmem:[#allocation4 + $0x7d0] sm:$0xff]
    %v820 = vld [vmem:[#allocation4 + $0x7d8] sm:$0xff]
    %v821 = vld [vmem:[#allocation4 + $0x7e0] sm:$0xff]
    %v822 = vld [vmem:[#allocation4 + $0x7e8] sm:$0xff]
    %v823 = vld [vmem:[#allocation4 + $0x7f0] sm:$0xff]
    %v824 = vld [vmem:[#allocation4 + $0x7f8] sm:$0xff]
    %v825 = vld [vmem:[#allocation4 + $0x800] sm:$0xff]
    %v826 = vld [vmem:[#allocation4 + $0x808] sm:$0xff]
    %v827 = vld [vmem:[#allocation4 + $0x810] sm:$0xff]
    %v828 = vld [vmem:[#allocation4 + $0x818] sm:$0xff]
    %v829 = vld [vmem:[#allocation4 + $0x820] sm:$0xff]
    %v830 = vld [vmem:[#allocation4 + $0x828] sm:$0xff]
    %v831 = vld [vmem:[#allocation4 + $0x830] sm:$0xff]
    %v832 = vld [vmem:[#allocation4 + $0x838] sm:$0xff]
    %v833 = vld [vmem:[#allocation4 + $0x840] sm:$0xff]
    %v834 = vld [vmem:[#allocation4 + $0x848] sm:$0xff]
    %v835 = vld [vmem:[#allocation4 + $0x850] sm:$0xff]
    %v836 = vld [vmem:[#allocation4 + $0x858] sm:$0xff]
    %v837 = vld [vmem:[#allocation4 + $0x860] sm:$0xff]
    %v838 = vld [vmem:[#allocation4 + $0x868] sm:$0xff]
    %v839 = vld [vmem:[#allocation4 + $0x870] sm:$0xff]
    %v840 = vld [vmem:[#allocation4 + $0x878] sm:$0xff]
    %v841 = vld [vmem:[#allocation4 + $0x880] sm:$0xff]
    %v842 = vld [vmem:[#allocation4 + $0x888] sm:$0xff]
    %v843 = vld [vmem:[#allocation4 + $0x890] sm:$0xff]
    %v844 = vld [vmem:[#allocation4 + $0x898] sm:$0xff]
    %v845 = vld [vmem:[#allocation4 + $0x8a0] sm:$0xff]
    %v846 = vld [vmem:[#allocation4 + $0x8a8] sm:$0xff]
    %v847 = vld [vmem:[#allocation4 + $0x8b0] sm:$0xff]
    %v848 = vld [vmem:[#allocation4 + $0x8b8] sm:$0xff]
    %v849 = vld [vmem:[#allocation4 + $0x8c0] sm:$0xff]
    %v850 = vld [vmem:[#allocation4 + $0x8c8] sm:$0xff]
    %v851 = vld [vmem:[#allocation4 + $0x8d0] sm:$0xff]
    %v852 = vld [vmem:[#allocation4 + $0x8d8] sm:$0xff]
    %v853 = vld [vmem:[#allocation4 + $0x8e0] sm:$0xff]
    %v854 = vld [vmem:[#allocation4 + $0x8e8] sm:$0xff]
    %v855 = vld [vmem:[#allocation4 + $0x8f0] sm:$0xff]
    %v856 = vld [vmem:[#allocation4 + $0x8f8] sm:$0xff]
    %v857 = vld [vmem:[#allocation4 + $0x900] sm:$0xff]
    %v858 = vld [vmem:[#allocation4 + $0x908] sm:$0xff]
    %v859 = vld [vmem:[#allocation4 + $0x910] sm:$0xff]
    %v860 = vld [vmem:[#allocation4 + $0x918] sm:$0xff]
    %v861 = vld [vmem:[#allocation4 + $0x920] sm:$0xff]
    %v862 = vld [vmem:[#allocation4 + $0x928] sm:$0xff]
    %v863 = vld [vmem:[#allocation4 + $0x930] sm:$0xff]
    %v864 = vld [vmem:[#allocation4 + $0x938] sm:$0xff]
    %v865 = vld [vmem:[#allocation4 + $0x940] sm:$0xff]
    %v866 = vld [vmem:[#allocation4 + $0x948] sm:$0xff]
    %v867 = vld [vmem:[#allocation4 + $0x950] sm:$0xff]
    %v868 = vld [vmem:[#allocation4 + $0x958] sm:$0xff]
    %v869 = vld [vmem:[#allocation4 + $0x960] sm:$0xff]
    %v870 = vld [vmem:[#allocation4 + $0x968] sm:$0xff]
    %v871 = vld [vmem:[#allocation4 + $0x970] sm:$0xff]
    %v872 = vld [vmem:[#allocation4 + $0x978] sm:$0xff]
    %v873 = vld [vmem:[#allocation4 + $0x980] sm:$0xff]
    %v874 = vld [vmem:[#allocation4 + $0x988] sm:$0xff]
    %v875 = vld [vmem:[#allocation4 + $0x990] sm:$0xff]
    %v876 = vld [vmem:[#allocation4 + $0x998] sm:$0xff]
    %v877 = vld [vmem:[#allocation4 + $0x9a0] sm:$0xff]
    %v878 = vld [vmem:[#allocation4 + $0x9a8] sm:$0xff]
    %v879 = vld [vmem:[#allocation4 + $0x9b0] sm:$0xff]
    %v880 = vld [vmem:[#allocation4 + $0x9b8] sm:$0xff]
    %v881 = vld [vmem:[#allocation4 + $0x9c0] sm:$0xff]
    %v882 = vld [vmem:[#allocation4 + $0x9c8] sm:$0xff]
    %v883 = vld [vmem:[#allocation4 + $0x9d0] sm:$0xff]
    %v884 = vld [vmem:[#allocation4 + $0x9d8] sm:$0xff]
    %v885 = vld [vmem:[#allocation4 + $0x9e0] sm:$0xff]
    %v886 = vld [vmem:[#allocation4 + $0x9e8] sm:$0xff]
    %v887 = vld [vmem:[#allocation4 + $0x9f0] sm:$0xff]
    %v888 = vld [vmem:[#allocation4 + $0x9f8] sm:$0xff]
    %v889 = vld [vmem:[#allocation4 + $0xa00] sm:$0xff]
    %v890 = vld [vmem:[#allocation4 + $0xa08] sm:$0xff]
    %v891 = vld [vmem:[#allocation4 + $0xa10] sm:$0xff]
    %v892 = vld [vmem:[#allocation4 + $0xa18] sm:$0xff]
    %v893 = vld [vmem:[#allocation4 + $0xa20] sm:$0xff]
    %v894 = vld [vmem:[#allocation4 + $0xa28] sm:$0xff]
    %v895 = vld [vmem:[#allocation4 + $0xa30] sm:$0xff]
    %v896 = vld [vmem:[#allocation4 + $0xa38] sm:$0xff]
    %v897 = vld [vmem:[#allocation4 + $0xa40] sm:$0xff]
    %v898 = vld [vmem:[#allocation4 + $0xa48] sm:$0xff]
    %v899 = vld [vmem:[#allocation4 + $0xa50] sm:$0xff]
    %v900 = vld [vmem:[#allocation4 + $0xa58] sm:$0xff]
    %v901 = vld [vmem:[#allocation4 + $0xa60] sm:$0xff]
    %v902 = vld [vmem:[#allocation4 + $0xa68] sm:$0xff]
    %v903 = vld [vmem:[#allocation4 + $0xa70] sm:$0xff]
    %v904 = vld [vmem:[#allocation4 + $0xa78] sm:$0xff]
    %v905 = vld [vmem:[#allocation4 + $0xa80] sm:$0xff]
    %v906 = vld [vmem:[#allocation4 + $0xa88] sm:$0xff]
    %v907 = vld [vmem:[#allocation4 + $0xa90] sm:$0xff]
    %v908 = vld [vmem:[#allocation4 + $0xa98] sm:$0xff]
    %v909 = vld [vmem:[#allocation4 + $0xaa0] sm:$0xff]
    %v910 = vld [vmem:[#allocation4 + $0xaa8] sm:$0xff]
    %v911 = vld [vmem:[#allocation4 + $0xab0] sm:$0xff]
    %v912 = vld [vmem:[#allocation4 + $0xab8] sm:$0xff]
    %v913 = vld [vmem:[#allocation4 + $0xac0] sm:$0xff]
    %v914 = vld [vmem:[#allocation4 + $0xac8] sm:$0xff]
    %v915 = vld [vmem:[#allocation4 + $0xad0] sm:$0xff]
    %v916 = vld [vmem:[#allocation4 + $0xad8] sm:$0xff]
    %v917 = vld [vmem:[#allocation4 + $0xae0] sm:$0xff]
    %v918 = vld [vmem:[#allocation4 + $0xae8] sm:$0xff]
    %v919 = vld [vmem:[#allocation4 + $0xaf0] sm:$0xff]
    %v920 = vld [vmem:[#allocation4 + $0xaf8] sm:$0xff]
    %v921 = vld [vmem:[#allocation4 + $0xb00] sm:$0xff]
    %v922 = vld [vmem:[#allocation4 + $0xb08] sm:$0xff]
    %v923 = vld [vmem:[#allocation4 + $0xb10] sm:$0xff]
    %v924 = vld [vmem:[#allocation4 + $0xb18] sm:$0xff]
    %v925 = vld [vmem:[#allocation4 + $0xb20] sm:$0xff]
    %v926 = vld [vmem:[#allocation4 + $0xb28] sm:$0xff]
    %v927 = vld [vmem:[#allocation4 + $0xb30] sm:$0xff]
    %v928 = vld [vmem:[#allocation4 + $0xb38] sm:$0xff]
    %v929 = vld [vmem:[#allocation4 + $0xb40] sm:$0xff]
    %v930 = vld [vmem:[#allocation4 + $0xb48] sm:$0xff]
    %v931 = vld [vmem:[#allocation4 + $0xb50] sm:$0xff]
    %v932 = vld [vmem:[#allocation4 + $0xb58] sm:$0xff]
    %v933 = vld [vmem:[#allocation4 + $0xb60] sm:$0xff]
    %v934 = vld [vmem:[#allocation4 + $0xb68] sm:$0xff]
    %v935 = vld [vmem:[#allocation4 + $0xb70] sm:$0xff]
    %v936 = vld [vmem:[#allocation4 + $0xb78] sm:$0xff]
    %v937 = vld [vmem:[#allocation4 + $0xb80] sm:$0xff]
    %v938 = vld [vmem:[#allocation4 + $0xb88] sm:$0xff]
    %v939 = vld [vmem:[#allocation4 + $0xb90] sm:$0xff]
    %v940 = vld [vmem:[#allocation4 + $0xb98] sm:$0xff]
    %v941 = vld [vmem:[#allocation4 + $0xba0] sm:$0xff]
    %v942 = vld [vmem:[#allocation4 + $0xba8] sm:$0xff]
    %v943 = vld [vmem:[#allocation4 + $0xbb0] sm:$0xff]
    %v944 = vld [vmem:[#allocation4 + $0xbb8] sm:$0xff]
    %v945 = vld [vmem:[#allocation4 + $0xbc0] sm:$0xff]
    %v946 = vld [vmem:[#allocation4 + $0xbc8] sm:$0xff]
    %v947 = vld [vmem:[#allocation4 + $0xbd0] sm:$0xff]
    %v948 = vld [vmem:[#allocation4 + $0xbd8] sm:$0xff]
    %v949 = vld [vmem:[#allocation4 + $0xbe0] sm:$0xff]
    %v950 = vld [vmem:[#allocation4 + $0xbe8] sm:$0xff]
    %v951 = vld [vmem:[#allocation4 + $0xbf0] sm:$0xff]
    %v952 = vld [vmem:[#allocation4 + $0xbf8] sm:$0xff]
    %v953 = vld [vmem:[#allocation4 + $0xc00] sm:$0xff]
    %v954 = vld [vmem:[#allocation4 + $0xc08] sm:$0xff]
    %v955 = vld [vmem:[#allocation4 + $0xc10] sm:$0xff]
    %v956 = vld [vmem:[#allocation4 + $0xc18] sm:$0xff]
    %v957 = vld [vmem:[#allocation4 + $0xc20] sm:$0xff]
    %v958 = vld [vmem:[#allocation4 + $0xc28] sm:$0xff]
    %v959 = vld [vmem:[#allocation4 + $0xc30] sm:$0xff]
    %v960 = vld [vmem:[#allocation4 + $0xc38] sm:$0xff]
    %v961 = vld [vmem:[#allocation4 + $0xc40] sm:$0xff]
    %v962 = vld [vmem:[#allocation4 + $0xc48] sm:$0xff]
    %v963 = vld [vmem:[#allocation4 + $0xc50] sm:$0xff]
    %v964 = vld [vmem:[#allocation4 + $0xc58] sm:$0xff]
    %v965 = vld [vmem:[#allocation4 + $0xc60] sm:$0xff]
    %v966 = vld [vmem:[#allocation4 + $0xc68] sm:$0xff]
    %v967 = vld [vmem:[#allocation4 + $0xc70] sm:$0xff]
    %v968 = vld [vmem:[#allocation4 + $0xc78] sm:$0xff]
    %v969 = vld [vmem:[#allocation4 + $0xc80] sm:$0xff]
    %v970 = vld [vmem:[#allocation4 + $0xc88] sm:$0xff]
    %v971 = vld [vmem:[#allocation4 + $0xc90] sm:$0xff]
    %v972 = vld [vmem:[#allocation4 + $0xc98] sm:$0xff]
    %v973 = vld [vmem:[#allocation4 + $0xca0] sm:$0xff]
    %v974 = vld [vmem:[#allocation4 + $0xca8] sm:$0xff]
    %v975 = vld [vmem:[#allocation4 + $0xcb0] sm:$0xff]
    %v976 = vld [vmem:[#allocation4 + $0xcb8] sm:$0xff]
    %v977 = vld [vmem:[#allocation4 + $0xcc0] sm:$0xff]
    %v978 = vld [vmem:[#allocation4 + $0xcc8] sm:$0xff]
    %v979 = vld [vmem:[#allocation4 + $0xcd0] sm:$0xff]
    %v980 = vld [vmem:[#allocation4 + $0xcd8] sm:$0xff]
    %v981 = vld [vmem:[#allocation4 + $0xce0] sm:$0xff]
    %v982 = vld [vmem:[#allocation4 + $0xce8] sm:$0xff]
    %v983 = vld [vmem:[#allocation4 + $0xcf0] sm:$0xff]
    %v984 = vld [vmem:[#allocation4 + $0xcf8] sm:$0xff]
    %v985 = vld [vmem:[#allocation4 + $0xd00] sm:$0xff]
    %v986 = vld [vmem:[#allocation4 + $0xd08] sm:$0xff]
    %v987 = vld [vmem:[#allocation4 + $0xd10] sm:$0xff]
    %v988 = vld [vmem:[#allocation4 + $0xd18] sm:$0xff]
    %v989 = vld [vmem:[#allocation4 + $0xd20] sm:$0xff]
    %v990 = vld [vmem:[#allocation4 + $0xd28] sm:$0xff]
    %v991 = vld [vmem:[#allocation4 + $0xd30] sm:$0xff]
    %v992 = vld [vmem:[#allocation4 + $0xd38] sm:$0xff]
    %v993 = vld [vmem:[#allocation4 + $0xd40] sm:$0xff]
    %v994 = vld [vmem:[#allocation4 + $0xd48] sm:$0xff]
    %v995 = vld [vmem:[#allocation4 + $0xd50] sm:$0xff]
    %v996 = vld [vmem:[#allocation4 + $0xd58] sm:$0xff]
    %v997 = vld [vmem:[#allocation4 + $0xd60] sm:$0xff]
    %v998 = vld [vmem:[#allocation4 + $0xd68] sm:$0xff]
    %v999 = vld [vmem:[#allocation4 + $0xd70] sm:$0xff]
    %v1000 = vld [vmem:[#allocation4 + $0xd78] sm:$0xff]
    %v1001 = vld [vmem:[#allocation4 + $0xd80] sm:$0xff]
    %v1002 = vld [vmem:[#allocation4 + $0xd88] sm:$0xff]
    %v1003 = vld [vmem:[#allocation4 + $0xd90] sm:$0xff]
    %v1004 = vld [vmem:[#allocation4 + $0xd98] sm:$0xff]
    %v1005 = vld [vmem:[#allocation4 + $0xda0] sm:$0xff]
    %v1006 = vld [vmem:[#allocation4 + $0xda8] sm:$0xff]
    %v1007 = vld [vmem:[#allocation4 + $0xdb0] sm:$0xff]
    %v1008 = vld [vmem:[#allocation4 + $0xdb8] sm:$0xff]
    %v1009 = vld [vmem:[#allocation4 + $0xdc0] sm:$0xff]
    %v1010 = vld [vmem:[#allocation4 + $0xdc8] sm:$0xff]
    %v1011 = vld [vmem:[#allocation4 + $0xdd0] sm:$0xff]
    %v1012 = vld [vmem:[#allocation4 + $0xdd8] sm:$0xff]
    %v1013 = vld [vmem:[#allocation4 + $0xde0] sm:$0xff]
    %v1014 = vld [vmem:[#allocation4 + $0xde8] sm:$0xff]
    %v1015 = vld [vmem:[#allocation4 + $0xdf0] sm:$0xff]
    %v1016 = vld [vmem:[#allocation4 + $0xdf8] sm:$0xff]
    %v1017 = vld [vmem:[#allocation4 + $0xe00] sm:$0xff]
    %v1018 = vld [vmem:[#allocation4 + $0xe08] sm:$0xff]
    %v1019 = vld [vmem:[#allocation4 + $0xe10] sm:$0xff]
    %v1020 = vld [vmem:[#allocation4 + $0xe18] sm:$0xff]
    %v1021 = vld [vmem:[#allocation4 + $0xe20] sm:$0xff]
    %v1022 = vld [vmem:[#allocation4 + $0xe28] sm:$0xff]
    %v1023 = vld [vmem:[#allocation4 + $0xe30] sm:$0xff]
    %v1024 = vld [vmem:[#allocation4 + $0xe38] sm:$0xff]
    %v1025 = vld [vmem:[#allocation4 + $0xe40] sm:$0xff]
    %v1026 = vld [vmem:[#allocation4 + $0xe48] sm:$0xff]
    %v1027 = vld [vmem:[#allocation4 + $0xe50] sm:$0xff]
    %v1028 = vld [vmem:[#allocation4 + $0xe58] sm:$0xff]
    %v1029 = vld [vmem:[#allocation4 + $0xe60] sm:$0xff]
    %v1030 = vld [vmem:[#allocation4 + $0xe68] sm:$0xff]
    %v1031 = vld [vmem:[#allocation4 + $0xe70] sm:$0xff]
    %v1032 = vld [vmem:[#allocation4 + $0xe78] sm:$0xff]
    %v1033 = vld [vmem:[#allocation4 + $0xe80] sm:$0xff]
    %v1034 = vld [vmem:[#allocation4 + $0xe88] sm:$0xff]
    %v1035 = vld [vmem:[#allocation4 + $0xe90] sm:$0xff]
    %v1036 = vld [vmem:[#allocation4 + $0xe98] sm:$0xff]
    %v1037 = vld [vmem:[#allocation4 + $0xea0] sm:$0xff]
    %v1038 = vld [vmem:[#allocation4 + $0xea8] sm:$0xff]
    %v1039 = vld [vmem:[#allocation4 + $0xeb0] sm:$0xff]
    %v1040 = vld [vmem:[#allocation4 + $0xeb8] sm:$0xff]
    %v1041 = vld [vmem:[#allocation4 + $0xec0] sm:$0xff]
    %v1042 = vld [vmem:[#allocation4 + $0xec8] sm:$0xff]
    %v1043 = vld [vmem:[#allocation4 + $0xed0] sm:$0xff]
    %v1044 = vld [vmem:[#allocation4 + $0xed8] sm:$0xff]
    %v1045 = vld [vmem:[#allocation4 + $0xee0] sm:$0xff]
    %v1046 = vld [vmem:[#allocation4 + $0xee8] sm:$0xff]
    %v1047 = vld [vmem:[#allocation4 + $0xef0] sm:$0xff]
    %v1048 = vld [vmem:[#allocation4 + $0xef8] sm:$0xff]
    %v1049 = vld [vmem:[#allocation4 + $0xf00] sm:$0xff]
    %v1050 = vld [vmem:[#allocation4 + $0xf08] sm:$0xff]
    %v1051 = vld [vmem:[#allocation4 + $0xf10] sm:$0xff]
    %v1052 = vld [vmem:[#allocation4 + $0xf18] sm:$0xff]
    %v1053 = vld [vmem:[#allocation4 + $0xf20] sm:$0xff]
    %v1054 = vld [vmem:[#allocation4 + $0xf28] sm:$0xff]
    %v1055 = vld [vmem:[#allocation4 + $0xf30] sm:$0xff]
    %v1056 = vld [vmem:[#allocation4 + $0xf38] sm:$0xff]
    %v1057 = vld [vmem:[#allocation4 + $0xf40] sm:$0xff]
    %v1058 = vld [vmem:[#allocation4 + $0xf48] sm:$0xff]
    %v1059 = vld [vmem:[#allocation4 + $0xf50] sm:$0xff]
    %v1060 = vld [vmem:[#allocation4 + $0xf58] sm:$0xff]
    %v1061 = vld [vmem:[#allocation4 + $0xf60] sm:$0xff]
    %v1062 = vld [vmem:[#allocation4 + $0xf68] sm:$0xff]
    %v1063 = vld [vmem:[#allocation4 + $0xf70] sm:$0xff]
    %v1064 = vld [vmem:[#allocation4 + $0xf78] sm:$0xff]
    %v1065 = vld [vmem:[#allocation4 + $0xf80] sm:$0xff]
    %v1066 = vld [vmem:[#allocation4 + $0xf88] sm:$0xff]
    %v1067 = vld [vmem:[#allocation4 + $0xf90] sm:$0xff]
    %v1068 = vld [vmem:[#allocation4 + $0xf98] sm:$0xff]
    %v1069 = vld [vmem:[#allocation4 + $0xfa0] sm:$0xff]
    %v1070 = vld [vmem:[#allocation4 + $0xfa8] sm:$0xff]
    %v1071 = vld [vmem:[#allocation4 + $0xfb0] sm:$0xff]
    %v1072 = vld [vmem:[#allocation4 + $0xfb8] sm:$0xff]
    %v1073 = vld [vmem:[#allocation4 + $0xfc0] sm:$0xff]
    %v1074 = vld [vmem:[#allocation4 + $0xfc8] sm:$0xff]
    %v1075 = vld [vmem:[#allocation4 + $0xfd0] sm:$0xff]
    %v1076 = vld [vmem:[#allocation4 + $0xfd8] sm:$0xff]
    %v1077 = vld [vmem:[#allocation4 + $0xfe0] sm:$0xff]
    %v1078 = vld [vmem:[#allocation4 + $0xfe8] sm:$0xff]
    %v1079 = vld [vmem:[#allocation4 + $0xff0] sm:$0xff]
    %v1080 = vld [vmem:[#allocation4 + $0xff8] sm:$0xff]
    %1081 = vmatpush.msra.mxu0 %v689
    %1082 = vmatpush.msra.mxu0 %v681
    %1083 = vmatpush.msra.mxu0 %v673
    %1084 = vmatpush.msra.mxu0 %v665
    %1085 = vmatpush.msra.mxu0 %v657
    %1086 = vmatpush.msra.mxu0 %v649
    %1087 = vmatpush.msra.mxu0 %v641
    %1088 = vmatpush.msra.mxu0 %v633
    %1089 = vmatpush.msra.mxu0 %v625
    %1090 = vmatpush.msra.mxu0 %v617
    %1091 = vmatpush.msra.mxu0 %v609
    %1092 = vmatpush.msra.mxu0 %v601
    %1093 = vmatpush.msra.mxu0 %v593
    %1094 = vmatpush.msra.mxu0 %v585
    %1095 = vmatpush.msra.mxu0 %v577
    %1096 = vmatpush.msra.mxu0 %v569
    %1097 = vmatmul.f32.gmra.mxu0 %v565
    %v1098 = vpop.f32.mrf.mxu0
    %v1099 = vadd.f32 0.0, %v1098
    %1100 = vdwg.mxu0
    %1101 = vmatpush.msra.mxu0 %v817
    %1102 = vmatpush.msra.mxu0 %v809
    %1103 = vmatpush.msra.mxu0 %v801
    %1104 = vmatpush.msra.mxu0 %v793
    %1105 = vmatpush.msra.mxu0 %v785
    %1106 = vmatpush.msra.mxu0 %v777
    %1107 = vmatpush.msra.mxu0 %v769
    %1108 = vmatpush.msra.mxu0 %v761
    %1109 = vmatpush.msra.mxu0 %v753
    %1110 = vmatpush.msra.mxu0 %v745
    %1111 = vmatpush.msra.mxu0 %v737
    %1112 = vmatpush.msra.mxu0 %v729
    %1113 = vmatpush.msra.mxu0 %v721
    %1114 = vmatpush.msra.mxu0 %v713
    %1115 = vmatpush.msra.mxu0 %v705
    %1116 = vmatpush.msra.mxu0 %v697
    %1117 = vmatmul.f32.gmra.mxu0 %v566
    %v1118 = vpop.f32.mrf.mxu0
    %v1119 = vadd.f32 %v1099, %v1118
    %1120 = vdwg.mxu0
    %1121 = vmatpush.msra.mxu0 %v945
    %1122 = vmatpush.msra.mxu0 %v937
    %1123 = vmatpush.msra.mxu0 %v929
    %1124 = vmatpush.msra.mxu0 %v921
    %1125 = vmatpush.msra.mxu0 %v913
    %1126 = vmatpush.msra.mxu0 %v905
    %1127 = vmatpush.msra.mxu0 %v897
    %1128 = vmatpush.msra.mxu0 %v889
    %1129 = vmatpush.msra.mxu0 %v881
    %1130 = vmatpush.msra.mxu0 %v873
    %1131 = vmatpush.msra.mxu0 %v865
    %1132 = vmatpush.msra.mxu0 %v857
    %1133 = vmatpush.msra.mxu0 %v849
    %1134 = vmatpush.msra.mxu0 %v841
    %1135 = vmatpush.msra.mxu0 %v833
    %1136 = vmatpush.msra.mxu0 %v825
    %1137 = vmatmul.f32.gmra.mxu0 %v567
    %v1138 = vpop.f32.mrf.mxu0
    %v1139 = vadd.f32 %v1119, %v1138
    %1140 = vdwg.mxu0
    %1141 = vmatpush.msra.mxu0 %v1073
    %1142 = vmatpush.msra.mxu0 %v1065
    %1143 = vmatpush.msra.mxu0 %v1057
    %1144 = vmatpush.msra.mxu0 %v1049
    %1145 = vmatpush.msra.mxu0 %v1041
    %1146 = vmatpush.msra.mxu0 %v1033
    %1147 = vmatpush.msra.mxu0 %v1025
    %1148 = vmatpush.msra.mxu0 %v1017
    %1149 = vmatpush.msra.mxu0 %v1009
    %1150 = vmatpush.msra.mxu0 %v1001
    %1151 = vmatpush.msra.mxu0 %v993
    %1152 = vmatpush.msra.mxu0 %v985
    %1153 = vmatpush.msra.mxu0 %v977
    %1154 = vmatpush.msra.mxu0 %v969
    %1155 = vmatpush.msra.mxu0 %v961
    %1156 = vmatpush.msra.mxu0 %v953
    %1157 = vmatmul.f32.gmra.mxu0 %v568
    %v1158 = vpop.f32.mrf.mxu0
    %v1159 = vadd.f32 %v1139, %v1158
    %1160 = vdwg.mxu0
    %1161 = vmatpush.msra.mxu0 %v690
    %1162 = vmatpush.msra.mxu0 %v682
    %1163 = vmatpush.msra.mxu0 %v674
    %1164 = vmatpush.msra.mxu0 %v666
    %1165 = vmatpush.msra.mxu0 %v658
    %1166 = vmatpush.msra.mxu0 %v650
    %1167 = vmatpush.msra.mxu0 %v642
    %1168 = vmatpush.msra.mxu0 %v634
    %1169 = vmatpush.msra.mxu0 %v626
    %1170 = vmatpush.msra.mxu0 %v618
    %1171 = vmatpush.msra.mxu0 %v610
    %1172 = vmatpush.msra.mxu0 %v602
    %1173 = vmatpush.msra.mxu0 %v594
    %1174 = vmatpush.msra.mxu0 %v586
    %1175 = vmatpush.msra.mxu0 %v578
    %1176 = vmatpush.msra.mxu0 %v570
    %1177 = vmatmul.f32.gmra.mxu0 %v565
    %v1178 = vpop.f32.mrf.mxu0
    %v1179 = vadd.f32 0.0, %v1178
    %1180 = vdwg.mxu0
    %1181 = vmatpush.msra.mxu0 %v818
    %1182 = vmatpush.msra.mxu0 %v810
    %1183 = vmatpush.msra.mxu0 %v802
    %1184 = vmatpush.msra.mxu0 %v794
    %1185 = vmatpush.msra.mxu0 %v786
    %1186 = vmatpush.msra.mxu0 %v778
    %1187 = vmatpush.msra.mxu0 %v770
    %1188 = vmatpush.msra.mxu0 %v762
    %1189 = vmatpush.msra.mxu0 %v754
    %1190 = vmatpush.msra.mxu0 %v746
    %1191 = vmatpush.msra.mxu0 %v738
    %1192 = vmatpush.msra.mxu0 %v730
    %1193 = vmatpush.msra.mxu0 %v722
    %1194 = vmatpush.msra.mxu0 %v714
    %1195 = vmatpush.msra.mxu0 %v706
    %1196 = vmatpush.msra.mxu0 %v698
    %1197 = vmatmul.f32.gmra.mxu0 %v566
    %v1198 = vpop.f32.mrf.mxu0
    %v1199 = vadd.f32 %v1179, %v1198
    %1200 = vdwg.mxu0
    %1201 = vmatpush.msra.mxu0 %v946
    %1202 = vmatpush.msra.mxu0 %v938
    %1203 = vmatpush.msra.mxu0 %v930
    %1204 = vmatpush.msra.mxu0 %v922
    %1205 = vmatpush.msra.mxu0 %v914
    %1206 = vmatpush.msra.mxu0 %v906
    %1207 = vmatpush.msra.mxu0 %v898
    %1208 = vmatpush.msra.mxu0 %v890
    %1209 = vmatpush.msra.mxu0 %v882
    %1210 = vmatpush.msra.mxu0 %v874
    %1211 = vmatpush.msra.mxu0 %v866
    %1212 = vmatpush.msra.mxu0 %v858
    %1213 = vmatpush.msra.mxu0 %v850
    %1214 = vmatpush.msra.mxu0 %v842
    %1215 = vmatpush.msra.mxu0 %v834
    %1216 = vmatpush.msra.mxu0 %v826
    %1217 = vmatmul.f32.gmra.mxu0 %v567
    %v1218 = vpop.f32.mrf.mxu0
    %v1219 = vadd.f32 %v1199, %v1218
    %1220 = vdwg.mxu0
    %1221 = vmatpush.msra.mxu0 %v1074
    %1222 = vmatpush.msra.mxu0 %v1066
    %1223 = vmatpush.msra.mxu0 %v1058
    %1224 = vmatpush.msra.mxu0 %v1050
    %1225 = vmatpush.msra.mxu0 %v1042
    %1226 = vmatpush.msra.mxu0 %v1034
    %1227 = vmatpush.msra.mxu0 %v1026
    %1228 = vmatpush.msra.mxu0 %v1018
    %1229 = vmatpush.msra.mxu0 %v1010
    %1230 = vmatpush.msra.mxu0 %v1002
    %1231 = vmatpush.msra.mxu0 %v994
    %1232 = vmatpush.msra.mxu0 %v986
    %1233 = vmatpush.msra.mxu0 %v978
    %1234 = vmatpush.msra.mxu0 %v970
    %1235 = vmatpush.msra.mxu0 %v962
    %1236 = vmatpush.msra.mxu0 %v954
    %1237 = vmatmul.f32.gmra.mxu0 %v568
    %v1238 = vpop.f32.mrf.mxu0
    %v1239 = vadd.f32 %v1219, %v1238
    %1240 = vdwg.mxu0
    %1241 = vmatpush.msra.mxu0 %v691
    %1242 = vmatpush.msra.mxu0 %v683
    %1243 = vmatpush.msra.mxu0 %v675
    %1244 = vmatpush.msra.mxu0 %v667
    %1245 = vmatpush.msra.mxu0 %v659
    %1246 = vmatpush.msra.mxu0 %v651
    %1247 = vmatpush.msra.mxu0 %v643
    %1248 = vmatpush.msra.mxu0 %v635
    %1249 = vmatpush.msra.mxu0 %v627
    %1250 = vmatpush.msra.mxu0 %v619
    %1251 = vmatpush.msra.mxu0 %v611
    %1252 = vmatpush.msra.mxu0 %v603
    %1253 = vmatpush.msra.mxu0 %v595
    %1254 = vmatpush.msra.mxu0 %v587
    %1255 = vmatpush.msra.mxu0 %v579
    %1256 = vmatpush.msra.mxu0 %v571
    %1257 = vmatmul.f32.gmra.mxu0 %v565
    %v1258 = vpop.f32.mrf.mxu0
    %v1259 = vadd.f32 0.0, %v1258
    %1260 = vdwg.mxu0
    %1261 = vmatpush.msra.mxu0 %v819
    %1262 = vmatpush.msra.mxu0 %v811
    %1263 = vmatpush.msra.mxu0 %v803
    %1264 = vmatpush.msra.mxu0 %v795
    %1265 = vmatpush.msra.mxu0 %v787
    %1266 = vmatpush.msra.mxu0 %v779
    %1267 = vmatpush.msra.mxu0 %v771
    %1268 = vmatpush.msra.mxu0 %v763
    %1269 = vmatpush.msra.mxu0 %v755
    %1270 = vmatpush.msra.mxu0 %v747
    %1271 = vmatpush.msra.mxu0 %v739
    %1272 = vmatpush.msra.mxu0 %v731
    %1273 = vmatpush.msra.mxu0 %v723
    %1274 = vmatpush.msra.mxu0 %v715
    %1275 = vmatpush.msra.mxu0 %v707
    %1276 = vmatpush.msra.mxu0 %v699
    %1277 = vmatmul.f32.gmra.mxu0 %v566
    %v1278 = vpop.f32.mrf.mxu0
    %v1279 = vadd.f32 %v1259, %v1278
    %1280 = vdwg.mxu0
    %1281 = vmatpush.msra.mxu0 %v947
    %1282 = vmatpush.msra.mxu0 %v939
    %1283 = vmatpush.msra.mxu0 %v931
    %1284 = vmatpush.msra.mxu0 %v923
    %1285 = vmatpush.msra.mxu0 %v915
    %1286 = vmatpush.msra.mxu0 %v907
    %1287 = vmatpush.msra.mxu0 %v899
    %1288 = vmatpush.msra.mxu0 %v891
    %1289 = vmatpush.msra.mxu0 %v883
    %1290 = vmatpush.msra.mxu0 %v875
    %1291 = vmatpush.msra.mxu0 %v867
    %1292 = vmatpush.msra.mxu0 %v859
    %1293 = vmatpush.msra.mxu0 %v851
    %1294 = vmatpush.msra.mxu0 %v843
    %1295 = vmatpush.msra.mxu0 %v835
    %1296 = vmatpush.msra.mxu0 %v827
    %1297 = vmatmul.f32.gmra.mxu0 %v567
    %v1298 = vpop.f32.mrf.mxu0
    %v1299 = vadd.f32 %v1279, %v1298
    %1300 = vdwg.mxu0
    %1301 = vmatpush.msra.mxu0 %v1075
    %1302 = vmatpush.msra.mxu0 %v1067
    %1303 = vmatpush.msra.mxu0 %v1059
    %1304 = vmatpush.msra.mxu0 %v1051
    %1305 = vmatpush.msra.mxu0 %v1043
    %1306 = vmatpush.msra.mxu0 %v1035
    %1307 = vmatpush.msra.mxu0 %v1027
    %1308 = vmatpush.msra.mxu0 %v1019
    %1309 = vmatpush.msra.mxu0 %v1011
    %1310 = vmatpush.msra.mxu0 %v1003
    %1311 = vmatpush.msra.mxu0 %v995
    %1312 = vmatpush.msra.mxu0 %v987
    %1313 = vmatpush.msra.mxu0 %v979
    %1314 = vmatpush.msra.mxu0 %v971
    %1315 = vmatpush.msra.mxu0 %v963
    %1316 = vmatpush.msra.mxu0 %v955
    %1317 = vmatmul.f32.gmra.mxu0 %v568
    %v1318 = vpop.f32.mrf.mxu0
    %v1319 = vadd.f32 %v1299, %v1318
    %1320 = vdwg.mxu0
    %1321 = vmatpush.msra.mxu0 %v692
    %1322 = vmatpush.msra.mxu0 %v684
    %1323 = vmatpush.msra.mxu0 %v676
    %1324 = vmatpush.msra.mxu0 %v668
    %1325 = vmatpush.msra.mxu0 %v660
    %1326 = vmatpush.msra.mxu0 %v652
    %1327 = vmatpush.msra.mxu0 %v644
    %1328 = vmatpush.msra.mxu0 %v636
    %1329 = vmatpush.msra.mxu0 %v628
    %1330 = vmatpush.msra.mxu0 %v620
    %1331 = vmatpush.msra.mxu0 %v612
    %1332 = vmatpush.msra.mxu0 %v604
    %1333 = vmatpush.msra.mxu0 %v596
    %1334 = vmatpush.msra.mxu0 %v588
    %1335 = vmatpush.msra.mxu0 %v580
    %1336 = vmatpush.msra.mxu0 %v572
    %1337 = vmatmul.f32.gmra.mxu0 %v565
    %v1338 = vpop.f32.mrf.mxu0
    %v1339 = vadd.f32 0.0, %v1338
    %1340 = vdwg.mxu0
    %1341 = vmatpush.msra.mxu0 %v820
    %1342 = vmatpush.msra.mxu0 %v812
    %1343 = vmatpush.msra.mxu0 %v804
    %1344 = vmatpush.msra.mxu0 %v796
    %1345 = vmatpush.msra.mxu0 %v788
    %1346 = vmatpush.msra.mxu0 %v780
    %1347 = vmatpush.msra.mxu0 %v772
    %1348 = vmatpush.msra.mxu0 %v764
    %1349 = vmatpush.msra.mxu0 %v756
    %1350 = vmatpush.msra.mxu0 %v748
    %1351 = vmatpush.msra.mxu0 %v740
    %1352 = vmatpush.msra.mxu0 %v732
    %1353 = vmatpush.msra.mxu0 %v724
    %1354 = vmatpush.msra.mxu0 %v716
    %1355 = vmatpush.msra.mxu0 %v708
    %1356 = vmatpush.msra.mxu0 %v700
    %1357 = vmatmul.f32.gmra.mxu0 %v566
    %v1358 = vpop.f32.mrf.mxu0
    %v1359 = vadd.f32 %v1339, %v1358
    %1360 = vdwg.mxu0
    %1361 = vmatpush.msra.mxu0 %v948
    %1362 = vmatpush.msra.mxu0 %v940
    %1363 = vmatpush.msra.mxu0 %v932
    %1364 = vmatpush.msra.mxu0 %v924
    %1365 = vmatpush.msra.mxu0 %v916
    %1366 = vmatpush.msra.mxu0 %v908
    %1367 = vmatpush.msra.mxu0 %v900
    %1368 = vmatpush.msra.mxu0 %v892
    %1369 = vmatpush.msra.mxu0 %v884
    %1370 = vmatpush.msra.mxu0 %v876
    %1371 = vmatpush.msra.mxu0 %v868
    %1372 = vmatpush.msra.mxu0 %v860
    %1373 = vmatpush.msra.mxu0 %v852
    %1374 = vmatpush.msra.mxu0 %v844
    %1375 = vmatpush.msra.mxu0 %v836
    %1376 = vmatpush.msra.mxu0 %v828
    %1377 = vmatmul.f32.gmra.mxu0 %v567
    %v1378 = vpop.f32.mrf.mxu0
    %v1379 = vadd.f32 %v1359, %v1378
    %1380 = vdwg.mxu0
    %1381 = vmatpush.msra.mxu0 %v1076
    %1382 = vmatpush.msra.mxu0 %v1068
    %1383 = vmatpush.msra.mxu0 %v1060
    %1384 = vmatpush.msra.mxu0 %v1052
    %1385 = vmatpush.msra.mxu0 %v1044
    %1386 = vmatpush.msra.mxu0 %v1036
    %1387 = vmatpush.msra.mxu0 %v1028
    %1388 = vmatpush.msra.mxu0 %v1020
    %1389 = vmatpush.msra.mxu0 %v1012
    %1390 = vmatpush.msra.mxu0 %v1004
    %1391 = vmatpush.msra.mxu0 %v996
    %1392 = vmatpush.msra.mxu0 %v988
    %1393 = vmatpush.msra.mxu0 %v980
    %1394 = vmatpush.msra.mxu0 %v972
    %1395 = vmatpush.msra.mxu0 %v964
    %1396 = vmatpush.msra.mxu0 %v956
    %1397 = vmatmul.f32.gmra.mxu0 %v568
    %v1398 = vpop.f32.mrf.mxu0
    %v1399 = vadd.f32 %v1379, %v1398
    %1400 = vdwg.mxu0
    %1401 = vmatpush.msra.mxu0 %v693
    %1402 = vmatpush.msra.mxu0 %v685
    %1403 = vmatpush.msra.mxu0 %v677
    %1404 = vmatpush.msra.mxu0 %v669
    %1405 = vmatpush.msra.mxu0 %v661
    %1406 = vmatpush.msra.mxu0 %v653
    %1407 = vmatpush.msra.mxu0 %v645
    %1408 = vmatpush.msra.mxu0 %v637
    %1409 = vmatpush.msra.mxu0 %v629
    %1410 = vmatpush.msra.mxu0 %v621
    %1411 = vmatpush.msra.mxu0 %v613
    %1412 = vmatpush.msra.mxu0 %v605
    %1413 = vmatpush.msra.mxu0 %v597
    %1414 = vmatpush.msra.mxu0 %v589
    %1415 = vmatpush.msra.mxu0 %v581
    %1416 = vmatpush.msra.mxu0 %v573
    %1417 = vmatmul.f32.gmra.mxu0 %v565
    %v1418 = vpop.f32.mrf.mxu0
    %v1419 = vadd.f32 0.0, %v1418
    %1420 = vdwg.mxu0
    %1421 = vmatpush.msra.mxu0 %v821
    %1422 = vmatpush.msra.mxu0 %v813
    %1423 = vmatpush.msra.mxu0 %v805
    %1424 = vmatpush.msra.mxu0 %v797
    %1425 = vmatpush.msra.mxu0 %v789
    %1426 = vmatpush.msra.mxu0 %v781
    %1427 = vmatpush.msra.mxu0 %v773
    %1428 = vmatpush.msra.mxu0 %v765
    %1429 = vmatpush.msra.mxu0 %v757
    %1430 = vmatpush.msra.mxu0 %v749
    %1431 = vmatpush.msra.mxu0 %v741
    %1432 = vmatpush.msra.mxu0 %v733
    %1433 = vmatpush.msra.mxu0 %v725
    %1434 = vmatpush.msra.mxu0 %v717
    %1435 = vmatpush.msra.mxu0 %v709
    %1436 = vmatpush.msra.mxu0 %v701
    %1437 = vmatmul.f32.gmra.mxu0 %v566
    %v1438 = vpop.f32.mrf.mxu0
    %v1439 = vadd.f32 %v1419, %v1438
    %1440 = vdwg.mxu0
    %1441 = vmatpush.msra.mxu0 %v949
    %1442 = vmatpush.msra.mxu0 %v941
    %1443 = vmatpush.msra.mxu0 %v933
    %1444 = vmatpush.msra.mxu0 %v925
    %1445 = vmatpush.msra.mxu0 %v917
    %1446 = vmatpush.msra.mxu0 %v909
    %1447 = vmatpush.msra.mxu0 %v901
    %1448 = vmatpush.msra.mxu0 %v893
    %1449 = vmatpush.msra.mxu0 %v885
    %1450 = vmatpush.msra.mxu0 %v877
    %1451 = vmatpush.msra.mxu0 %v869
    %1452 = vmatpush.msra.mxu0 %v861
    %1453 = vmatpush.msra.mxu0 %v853
    %1454 = vmatpush.msra.mxu0 %v845
    %1455 = vmatpush.msra.mxu0 %v837
    %1456 = vmatpush.msra.mxu0 %v829
    %1457 = vmatmul.f32.gmra.mxu0 %v567
    %v1458 = vpop.f32.mrf.mxu0
    %v1459 = vadd.f32 %v1439, %v1458
    %1460 = vdwg.mxu0
    %1461 = vmatpush.msra.mxu0 %v1077
    %1462 = vmatpush.msra.mxu0 %v1069
    %1463 = vmatpush.msra.mxu0 %v1061
    %1464 = vmatpush.msra.mxu0 %v1053
    %1465 = vmatpush.msra.mxu0 %v1045
    %1466 = vmatpush.msra.mxu0 %v1037
    %1467 = vmatpush.msra.mxu0 %v1029
    %1468 = vmatpush.msra.mxu0 %v1021
    %1469 = vmatpush.msra.mxu0 %v1013
    %1470 = vmatpush.msra.mxu0 %v1005
    %1471 = vmatpush.msra.mxu0 %v997
    %1472 = vmatpush.msra.mxu0 %v989
    %1473 = vmatpush.msra.mxu0 %v981
    %1474 = vmatpush.msra.mxu0 %v973
    %1475 = vmatpush.msra.mxu0 %v965
    %1476 = vmatpush.msra.mxu0 %v957
    %1477 = vmatmul.f32.gmra.mxu0 %v568
    %v1478 = vpop.f32.mrf.mxu0
    %v1479 = vadd.f32 %v1459, %v1478
    %1480 = vdwg.mxu0
    %1481 = vmatpush.msra.mxu0 %v694
    %1482 = vmatpush.msra.mxu0 %v686
    %1483 = vmatpush.msra.mxu0 %v678
    %1484 = vmatpush.msra.mxu0 %v670
    %1485 = vmatpush.msra.mxu0 %v662
    %1486 = vmatpush.msra.mxu0 %v654
    %1487 = vmatpush.msra.mxu0 %v646
    %1488 = vmatpush.msra.mxu0 %v638
    %1489 = vmatpush.msra.mxu0 %v630
    %1490 = vmatpush.msra.mxu0 %v622
    %1491 = vmatpush.msra.mxu0 %v614
    %1492 = vmatpush.msra.mxu0 %v606
    %1493 = vmatpush.msra.mxu0 %v598
    %1494 = vmatpush.msra.mxu0 %v590
    %1495 = vmatpush.msra.mxu0 %v582
    %1496 = vmatpush.msra.mxu0 %v574
    %1497 = vmatmul.f32.gmra.mxu0 %v565
    %v1498 = vpop.f32.mrf.mxu0
    %v1499 = vadd.f32 0.0, %v1498
    %1500 = vdwg.mxu0
    %1501 = vmatpush.msra.mxu0 %v822
    %1502 = vmatpush.msra.mxu0 %v814
    %1503 = vmatpush.msra.mxu0 %v806
    %1504 = vmatpush.msra.mxu0 %v798
    %1505 = vmatpush.msra.mxu0 %v790
    %1506 = vmatpush.msra.mxu0 %v782
    %1507 = vmatpush.msra.mxu0 %v774
    %1508 = vmatpush.msra.mxu0 %v766
    %1509 = vmatpush.msra.mxu0 %v758
    %1510 = vmatpush.msra.mxu0 %v750
    %1511 = vmatpush.msra.mxu0 %v742
    %1512 = vmatpush.msra.mxu0 %v734
    %1513 = vmatpush.msra.mxu0 %v726
    %1514 = vmatpush.msra.mxu0 %v718
    %1515 = vmatpush.msra.mxu0 %v710
    %1516 = vmatpush.msra.mxu0 %v702
    %1517 = vmatmul.f32.gmra.mxu0 %v566
    %v1518 = vpop.f32.mrf.mxu0
    %v1519 = vadd.f32 %v1499, %v1518
    %1520 = vdwg.mxu0
    %1521 = vmatpush.msra.mxu0 %v950
    %1522 = vmatpush.msra.mxu0 %v942
    %1523 = vmatpush.msra.mxu0 %v934
    %1524 = vmatpush.msra.mxu0 %v926
    %1525 = vmatpush.msra.mxu0 %v918
    %1526 = vmatpush.msra.mxu0 %v910
    %1527 = vmatpush.msra.mxu0 %v902
    %1528 = vmatpush.msra.mxu0 %v894
    %1529 = vmatpush.msra.mxu0 %v886
    %1530 = vmatpush.msra.mxu0 %v878
    %1531 = vmatpush.msra.mxu0 %v870
    %1532 = vmatpush.msra.mxu0 %v862
    %1533 = vmatpush.msra.mxu0 %v854
    %1534 = vmatpush.msra.mxu0 %v846
    %1535 = vmatpush.msra.mxu0 %v838
    %1536 = vmatpush.msra.mxu0 %v830
    %1537 = vmatmul.f32.gmra.mxu0 %v567
    %v1538 = vpop.f32.mrf.mxu0
    %v1539 = vadd.f32 %v1519, %v1538
    %1540 = vdwg.mxu0
    %1541 = vmatpush.msra.mxu0 %v1078
    %1542 = vmatpush.msra.mxu0 %v1070
    %1543 = vmatpush.msra.mxu0 %v1062
    %1544 = vmatpush.msra.mxu0 %v1054
    %1545 = vmatpush.msra.mxu0 %v1046
    %1546 = vmatpush.msra.mxu0 %v1038
    %1547 = vmatpush.msra.mxu0 %v1030
    %1548 = vmatpush.msra.mxu0 %v1022
    %1549 = vmatpush.msra.mxu0 %v1014
    %1550 = vmatpush.msra.mxu0 %v1006
    %1551 = vmatpush.msra.mxu0 %v998
    %1552 = vmatpush.msra.mxu0 %v990
    %1553 = vmatpush.msra.mxu0 %v982
    %1554 = vmatpush.msra.mxu0 %v974
    %1555 = vmatpush.msra.mxu0 %v966
    %1556 = vmatpush.msra.mxu0 %v958
    %1557 = vmatmul.f32.gmra.mxu0 %v568
    %v1558 = vpop.f32.mrf.mxu0
    %v1559 = vadd.f32 %v1539, %v1558
    %1560 = vdwg.mxu0
    %1561 = vmatpush.msra.mxu0 %v695
    %1562 = vmatpush.msra.mxu0 %v687
    %1563 = vmatpush.msra.mxu0 %v679
    %1564 = vmatpush.msra.mxu0 %v671
    %1565 = vmatpush.msra.mxu0 %v663
    %1566 = vmatpush.msra.mxu0 %v655
    %1567 = vmatpush.msra.mxu0 %v647
    %1568 = vmatpush.msra.mxu0 %v639
    %1569 = vmatpush.msra.mxu0 %v631
    %1570 = vmatpush.msra.mxu0 %v623
    %1571 = vmatpush.msra.mxu0 %v615
    %1572 = vmatpush.msra.mxu0 %v607
    %1573 = vmatpush.msra.mxu0 %v599
    %1574 = vmatpush.msra.mxu0 %v591
    %1575 = vmatpush.msra.mxu0 %v583
    %1576 = vmatpush.msra.mxu0 %v575
    %1577 = vmatmul.f32.gmra.mxu0 %v565
    %v1578 = vpop.f32.mrf.mxu0
    %v1579 = vadd.f32 0.0, %v1578
    %1580 = vdwg.mxu0
    %1581 = vmatpush.msra.mxu0 %v823
    %1582 = vmatpush.msra.mxu0 %v815
    %1583 = vmatpush.msra.mxu0 %v807
    %1584 = vmatpush.msra.mxu0 %v799
    %1585 = vmatpush.msra.mxu0 %v791
    %1586 = vmatpush.msra.mxu0 %v783
    %1587 = vmatpush.msra.mxu0 %v775
    %1588 = vmatpush.msra.mxu0 %v767
    %1589 = vmatpush.msra.mxu0 %v759
    %1590 = vmatpush.msra.mxu0 %v751
    %1591 = vmatpush.msra.mxu0 %v743
    %1592 = vmatpush.msra.mxu0 %v735
    %1593 = vmatpush.msra.mxu0 %v727
    %1594 = vmatpush.msra.mxu0 %v719
    %1595 = vmatpush.msra.mxu0 %v711
    %1596 = vmatpush.msra.mxu0 %v703
    %1597 = vmatmul.f32.gmra.mxu0 %v566
    %v1598 = vpop.f32.mrf.mxu0
    %v1599 = vadd.f32 %v1579, %v1598
    %1600 = vdwg.mxu0
    %1601 = vmatpush.msra.mxu0 %v951
    %1602 = vmatpush.msra.mxu0 %v943
    %1603 = vmatpush.msra.mxu0 %v935
    %1604 = vmatpush.msra.mxu0 %v927
    %1605 = vmatpush.msra.mxu0 %v919
    %1606 = vmatpush.msra.mxu0 %v911
    %1607 = vmatpush.msra.mxu0 %v903
    %1608 = vmatpush.msra.mxu0 %v895
    %1609 = vmatpush.msra.mxu0 %v887
    %1610 = vmatpush.msra.mxu0 %v879
    %1611 = vmatpush.msra.mxu0 %v871
    %1612 = vmatpush.msra.mxu0 %v863
    %1613 = vmatpush.msra.mxu0 %v855
    %1614 = vmatpush.msra.mxu0 %v847
    %1615 = vmatpush.msra.mxu0 %v839
    %1616 = vmatpush.msra.mxu0 %v831
    %1617 = vmatmul.f32.gmra.mxu0 %v567
    %v1618 = vpop.f32.mrf.mxu0
    %v1619 = vadd.f32 %v1599, %v1618
    %1620 = vdwg.mxu0
    %1621 = vmatpush.msra.mxu0 %v1079
    %1622 = vmatpush.msra.mxu0 %v1071
    %1623 = vmatpush.msra.mxu0 %v1063
    %1624 = vmatpush.msra.mxu0 %v1055
    %1625 = vmatpush.msra.mxu0 %v1047
    %1626 = vmatpush.msra.mxu0 %v1039
    %1627 = vmatpush.msra.mxu0 %v1031
    %1628 = vmatpush.msra.mxu0 %v1023
    %1629 = vmatpush.msra.mxu0 %v1015
    %1630 = vmatpush.msra.mxu0 %v1007
    %1631 = vmatpush.msra.mxu0 %v999
    %1632 = vmatpush.msra.mxu0 %v991
    %1633 = vmatpush.msra.mxu0 %v983
    %1634 = vmatpush.msra.mxu0 %v975
    %1635 = vmatpush.msra.mxu0 %v967
    %1636 = vmatpush.msra.mxu0 %v959
    %1637 = vmatmul.f32.gmra.mxu0 %v568
    %v1638 = vpop.f32.mrf.mxu0
    %v1639 = vadd.f32 %v1619, %v1638
    %1640 = vdwg.mxu0
    %1641 = vmatpush.msra.mxu0 %v696
    %1642 = vmatpush.msra.mxu0 %v688
    %1643 = vmatpush.msra.mxu0 %v680
    %1644 = vmatpush.msra.mxu0 %v672
    %1645 = vmatpush.msra.mxu0 %v664
    %1646 = vmatpush.msra.mxu0 %v656
    %1647 = vmatpush.msra.mxu0 %v648
    %1648 = vmatpush.msra.mxu0 %v640
    %1649 = vmatpush.msra.mxu0 %v632
    %1650 = vmatpush.msra.mxu0 %v624
    %1651 = vmatpush.msra.mxu0 %v616
    %1652 = vmatpush.msra.mxu0 %v608
    %1653 = vmatpush.msra.mxu0 %v600
    %1654 = vmatpush.msra.mxu0 %v592
    %1655 = vmatpush.msra.mxu0 %v584
    %1656 = vmatpush.msra.mxu0 %v576
    %1657 = vmatmul.f32.gmra.mxu0 %v565
    %v1658 = vpop.f32.mrf.mxu0
    %v1659 = vadd.f32 0.0, %v1658
    %1660 = vdwg.mxu0
    %1661 = vmatpush.msra.mxu0 %v824
    %1662 = vmatpush.msra.mxu0 %v816
    %1663 = vmatpush.msra.mxu0 %v808
    %1664 = vmatpush.msra.mxu0 %v800
    %1665 = vmatpush.msra.mxu0 %v792
    %1666 = vmatpush.msra.mxu0 %v784
    %1667 = vmatpush.msra.mxu0 %v776
    %1668 = vmatpush.msra.mxu0 %v768
    %1669 = vmatpush.msra.mxu0 %v760
    %1670 = vmatpush.msra.mxu0 %v752
    %1671 = vmatpush.msra.mxu0 %v744
    %1672 = vmatpush.msra.mxu0 %v736
    %1673 = vmatpush.msra.mxu0 %v728
    %1674 = vmatpush.msra.mxu0 %v720
    %1675 = vmatpush.msra.mxu0 %v712
    %1676 = vmatpush.msra.mxu0 %v704
    %1677 = vmatmul.f32.gmra.mxu0 %v566
    %v1678 = vpop.f32.mrf.mxu0
    %v1679 = vadd.f32 %v1659, %v1678
    %1680 = vdwg.mxu0
    %1681 = vmatpush.msra.mxu0 %v952
    %1682 = vmatpush.msra.mxu0 %v944
    %1683 = vmatpush.msra.mxu0 %v936
    %1684 = vmatpush.msra.mxu0 %v928
    %1685 = vmatpush.msra.mxu0 %v920
    %1686 = vmatpush.msra.mxu0 %v912
    %1687 = vmatpush.msra.mxu0 %v904
    %1688 = vmatpush.msra.mxu0 %v896
    %1689 = vmatpush.msra.mxu0 %v888
    %1690 = vmatpush.msra.mxu0 %v880
    %1691 = vmatpush.msra.mxu0 %v872
    %1692 = vmatpush.msra.mxu0 %v864
    %1693 = vmatpush.msra.mxu0 %v856
    %1694 = vmatpush.msra.mxu0 %v848
    %1695 = vmatpush.msra.mxu0 %v840
    %1696 = vmatpush.msra.mxu0 %v832
    %1697 = vmatmul.f32.gmra.mxu0 %v567
    %v1698 = vpop.f32.mrf.mxu0
    %v1699 = vadd.f32 %v1679, %v1698
    %1700 = vdwg.mxu0
    %1701 = vmatpush.msra.mxu0 %v1080
    %1702 = vmatpush.msra.mxu0 %v1072
    %1703 = vmatpush.msra.mxu0 %v1064
    %1704 = vmatpush.msra.mxu0 %v1056
    %1705 = vmatpush.msra.mxu0 %v1048
    %1706 = vmatpush.msra.mxu0 %v1040
    %1707 = vmatpush.msra.mxu0 %v1032
    %1708 = vmatpush.msra.mxu0 %v1024
    %1709 = vmatpush.msra.mxu0 %v1016
    %1710 = vmatpush.msra.mxu0 %v1008
    %1711 = vmatpush.msra.mxu0 %v1000
    %1712 = vmatpush.msra.mxu0 %v992
    %1713 = vmatpush.msra.mxu0 %v984
    %1714 = vmatpush.msra.mxu0 %v976
    %1715 = vmatpush.msra.mxu0 %v968
    %1716 = vmatpush.msra.mxu0 %v960
    %1717 = vmatmul.f32.gmra.mxu0 %v568
    %v1718 = vpop.f32.mrf.mxu0
    %v1719 = vadd.f32 %v1699, %v1718
    %1720 = vdwg.mxu0
    %1721 = vmatpush.msra.mxu0 %v173
    %1722 = vmatpush.msra.mxu0 %v165
    %1723 = vmatpush.msra.mxu0 %v157
    %1724 = vmatpush.msra.mxu0 %v149
    %1725 = vmatpush.msra.mxu0 %v141
    %1726 = vmatpush.msra.mxu0 %v133
    %1727 = vmatpush.msra.mxu0 %v125
    %1728 = vmatpush.msra.mxu0 %v117
    %1729 = vmatpush.msra.mxu0 %v109
    %1730 = vmatpush.msra.mxu0 %v101
    %1731 = vmatpush.msra.mxu0 %v93
    %1732 = vmatpush.msra.mxu0 %v85
    %1733 = vmatpush.msra.mxu0 %v77
    %1734 = vmatpush.msra.mxu0 %v69
    %1735 = vmatpush.msra.mxu0 %v61
    %1736 = vmatpush.msra.mxu0 %v53
    %1737 = vmatmul.f32.gmra.mxu0 %v49
    %v1738 = vpop.f32.mrf.mxu0
    %v1739 = vadd.f32 %v1159, %v1738
    %1740 = vdwg.mxu0
    %1741 = vmatpush.msra.mxu0 %v301
    %1742 = vmatpush.msra.mxu0 %v293
    %1743 = vmatpush.msra.mxu0 %v285
    %1744 = vmatpush.msra.mxu0 %v277
    %1745 = vmatpush.msra.mxu0 %v269
    %1746 = vmatpush.msra.mxu0 %v261
    %1747 = vmatpush.msra.mxu0 %v253
    %1748 = vmatpush.msra.mxu0 %v245
    %1749 = vmatpush.msra.mxu0 %v237
    %1750 = vmatpush.msra.mxu0 %v229
    %1751 = vmatpush.msra.mxu0 %v221
    %1752 = vmatpush.msra.mxu0 %v213
    %1753 = vmatpush.msra.mxu0 %v205
    %1754 = vmatpush.msra.mxu0 %v197
    %1755 = vmatpush.msra.mxu0 %v189
    %1756 = vmatpush.msra.mxu0 %v181
    %1757 = vmatmul.f32.gmra.mxu0 %v50
    %v1758 = vpop.f32.mrf.mxu0
    %v1759 = vadd.f32 %v1739, %v1758
    %1760 = vdwg.mxu0
    %1761 = vmatpush.msra.mxu0 %v429
    %1762 = vmatpush.msra.mxu0 %v421
    %1763 = vmatpush.msra.mxu0 %v413
    %1764 = vmatpush.msra.mxu0 %v405
    %1765 = vmatpush.msra.mxu0 %v397
    %1766 = vmatpush.msra.mxu0 %v389
    %1767 = vmatpush.msra.mxu0 %v381
    %1768 = vmatpush.msra.mxu0 %v373
    %1769 = vmatpush.msra.mxu0 %v365
    %1770 = vmatpush.msra.mxu0 %v357
    %1771 = vmatpush.msra.mxu0 %v349
    %1772 = vmatpush.msra.mxu0 %v341
    %1773 = vmatpush.msra.mxu0 %v333
    %1774 = vmatpush.msra.mxu0 %v325
    %1775 = vmatpush.msra.mxu0 %v317
    %1776 = vmatpush.msra.mxu0 %v309
    %1777 = vmatmul.f32.gmra.mxu0 %v51
    %v1778 = vpop.f32.mrf.mxu0
    %v1779 = vadd.f32 %v1759, %v1778
    %1780 = vdwg.mxu0
    %1781 = vmatpush.msra.mxu0 %v557
    %1782 = vmatpush.msra.mxu0 %v549
    %1783 = vmatpush.msra.mxu0 %v541
    %1784 = vmatpush.msra.mxu0 %v533
    %1785 = vmatpush.msra.mxu0 %v525
    %1786 = vmatpush.msra.mxu0 %v517
    %1787 = vmatpush.msra.mxu0 %v509
    %1788 = vmatpush.msra.mxu0 %v501
    %1789 = vmatpush.msra.mxu0 %v493
    %1790 = vmatpush.msra.mxu0 %v485
    %1791 = vmatpush.msra.mxu0 %v477
    %1792 = vmatpush.msra.mxu0 %v469
    %1793 = vmatpush.msra.mxu0 %v461
    %1794 = vmatpush.msra.mxu0 %v453
    %1795 = vmatpush.msra.mxu0 %v445
    %1796 = vmatpush.msra.mxu0 %v437
    %1797 = vmatmul.f32.gmra.mxu0 %v52
    %v1798 = vpop.f32.mrf.mxu0
    %v1799 = vadd.f32 %v1779, %v1798
    %1800 = vdwg.mxu0
    %1801 = vmatpush.msra.mxu0 %v174
    %1802 = vmatpush.msra.mxu0 %v166
    %1803 = vmatpush.msra.mxu0 %v158
    %1804 = vmatpush.msra.mxu0 %v150
    %1805 = vmatpush.msra.mxu0 %v142
    %1806 = vmatpush.msra.mxu0 %v134
    %1807 = vmatpush.msra.mxu0 %v126
    %1808 = vmatpush.msra.mxu0 %v118
    %1809 = vmatpush.msra.mxu0 %v110
    %1810 = vmatpush.msra.mxu0 %v102
    %1811 = vmatpush.msra.mxu0 %v94
    %1812 = vmatpush.msra.mxu0 %v86
    %1813 = vmatpush.msra.mxu0 %v78
    %1814 = vmatpush.msra.mxu0 %v70
    %1815 = vmatpush.msra.mxu0 %v62
    %1816 = vmatpush.msra.mxu0 %v54
    %1817 = vmatmul.f32.gmra.mxu0 %v49
    %v1818 = vpop.f32.mrf.mxu0
    %v1819 = vadd.f32 %v1239, %v1818
    %1820 = vdwg.mxu0
    %1821 = vmatpush.msra.mxu0 %v302
    %1822 = vmatpush.msra.mxu0 %v294
    %1823 = vmatpush.msra.mxu0 %v286
    %1824 = vmatpush.msra.mxu0 %v278
    %1825 = vmatpush.msra.mxu0 %v270
    %1826 = vmatpush.msra.mxu0 %v262
    %1827 = vmatpush.msra.mxu0 %v254
    %1828 = vmatpush.msra.mxu0 %v246
    %1829 = vmatpush.msra.mxu0 %v238
    %1830 = vmatpush.msra.mxu0 %v230
    %1831 = vmatpush.msra.mxu0 %v222
    %1832 = vmatpush.msra.mxu0 %v214
    %1833 = vmatpush.msra.mxu0 %v206
    %1834 = vmatpush.msra.mxu0 %v198
    %1835 = vmatpush.msra.mxu0 %v190
    %1836 = vmatpush.msra.mxu0 %v182
    %1837 = vmatmul.f32.gmra.mxu0 %v50
    %v1838 = vpop.f32.mrf.mxu0
    %v1839 = vadd.f32 %v1819, %v1838
    %1840 = vdwg.mxu0
    %1841 = vmatpush.msra.mxu0 %v430
    %1842 = vmatpush.msra.mxu0 %v422
    %1843 = vmatpush.msra.mxu0 %v414
    %1844 = vmatpush.msra.mxu0 %v406
    %1845 = vmatpush.msra.mxu0 %v398
    %1846 = vmatpush.msra.mxu0 %v390
    %1847 = vmatpush.msra.mxu0 %v382
    %1848 = vmatpush.msra.mxu0 %v374
    %1849 = vmatpush.msra.mxu0 %v366
    %1850 = vmatpush.msra.mxu0 %v358
    %1851 = vmatpush.msra.mxu0 %v350
    %1852 = vmatpush.msra.mxu0 %v342
    %1853 = vmatpush.msra.mxu0 %v334
    %1854 = vmatpush.msra.mxu0 %v326
    %1855 = vmatpush.msra.mxu0 %v318
    %1856 = vmatpush.msra.mxu0 %v310
    %1857 = vmatmul.f32.gmra.mxu0 %v51
    %v1858 = vpop.f32.mrf.mxu0
    %v1859 = vadd.f32 %v1839, %v1858
    %1860 = vdwg.mxu0
    %1861 = vmatpush.msra.mxu0 %v558
    %1862 = vmatpush.msra.mxu0 %v550
    %1863 = vmatpush.msra.mxu0 %v542
    %1864 = vmatpush.msra.mxu0 %v534
    %1865 = vmatpush.msra.mxu0 %v526
    %1866 = vmatpush.msra.mxu0 %v518
    %1867 = vmatpush.msra.mxu0 %v510
    %1868 = vmatpush.msra.mxu0 %v502
    %1869 = vmatpush.msra.mxu0 %v494
    %1870 = vmatpush.msra.mxu0 %v486
    %1871 = vmatpush.msra.mxu0 %v478
    %1872 = vmatpush.msra.mxu0 %v470
    %1873 = vmatpush.msra.mxu0 %v462
    %1874 = vmatpush.msra.mxu0 %v454
    %1875 = vmatpush.msra.mxu0 %v446
    %1876 = vmatpush.msra.mxu0 %v438
    %1877 = vmatmul.f32.gmra.mxu0 %v52
    %v1878 = vpop.f32.mrf.mxu0
    %v1879 = vadd.f32 %v1859, %v1878
    %1880 = vdwg.mxu0
    %1881 = vmatpush.msra.mxu0 %v175
    %1882 = vmatpush.msra.mxu0 %v167
    %1883 = vmatpush.msra.mxu0 %v159
    %1884 = vmatpush.msra.mxu0 %v151
    %1885 = vmatpush.msra.mxu0 %v143
    %1886 = vmatpush.msra.mxu0 %v135
    %1887 = vmatpush.msra.mxu0 %v127
    %1888 = vmatpush.msra.mxu0 %v119
    %1889 = vmatpush.msra.mxu0 %v111
    %1890 = vmatpush.msra.mxu0 %v103
    %1891 = vmatpush.msra.mxu0 %v95
    %1892 = vmatpush.msra.mxu0 %v87
    %1893 = vmatpush.msra.mxu0 %v79
    %1894 = vmatpush.msra.mxu0 %v71
    %1895 = vmatpush.msra.mxu0 %v63
    %1896 = vmatpush.msra.mxu0 %v55
    %1897 = vmatmul.f32.gmra.mxu0 %v49
    %v1898 = vpop.f32.mrf.mxu0
    %v1899 = vadd.f32 %v1319, %v1898
    %1900 = vdwg.mxu0
    %1901 = vmatpush.msra.mxu0 %v303
    %1902 = vmatpush.msra.mxu0 %v295
    %1903 = vmatpush.msra.mxu0 %v287
    %1904 = vmatpush.msra.mxu0 %v279
    %1905 = vmatpush.msra.mxu0 %v271
    %1906 = vmatpush.msra.mxu0 %v263
    %1907 = vmatpush.msra.mxu0 %v255
    %1908 = vmatpush.msra.mxu0 %v247
    %1909 = vmatpush.msra.mxu0 %v239
    %1910 = vmatpush.msra.mxu0 %v231
    %1911 = vmatpush.msra.mxu0 %v223
    %1912 = vmatpush.msra.mxu0 %v215
    %1913 = vmatpush.msra.mxu0 %v207
    %1914 = vmatpush.msra.mxu0 %v199
    %1915 = vmatpush.msra.mxu0 %v191
    %1916 = vmatpush.msra.mxu0 %v183
    %1917 = vmatmul.f32.gmra.mxu0 %v50
    %v1918 = vpop.f32.mrf.mxu0
    %v1919 = vadd.f32 %v1899, %v1918
    %1920 = vdwg.mxu0
    %1921 = vmatpush.msra.mxu0 %v431
    %1922 = vmatpush.msra.mxu0 %v423
    %1923 = vmatpush.msra.mxu0 %v415
    %1924 = vmatpush.msra.mxu0 %v407
    %1925 = vmatpush.msra.mxu0 %v399
    %1926 = vmatpush.msra.mxu0 %v391
    %1927 = vmatpush.msra.mxu0 %v383
    %1928 = vmatpush.msra.mxu0 %v375
    %1929 = vmatpush.msra.mxu0 %v367
    %1930 = vmatpush.msra.mxu0 %v359
    %1931 = vmatpush.msra.mxu0 %v351
    %1932 = vmatpush.msra.mxu0 %v343
    %1933 = vmatpush.msra.mxu0 %v335
    %1934 = vmatpush.msra.mxu0 %v327
    %1935 = vmatpush.msra.mxu0 %v319
    %1936 = vmatpush.msra.mxu0 %v311
    %1937 = vmatmul.f32.gmra.mxu0 %v51
    %v1938 = vpop.f32.mrf.mxu0
    %v1939 = vadd.f32 %v1919, %v1938
    %1940 = vdwg.mxu0
    %1941 = vmatpush.msra.mxu0 %v559
    %1942 = vmatpush.msra.mxu0 %v551
    %1943 = vmatpush.msra.mxu0 %v543
    %1944 = vmatpush.msra.mxu0 %v535
    %1945 = vmatpush.msra.mxu0 %v527
    %1946 = vmatpush.msra.mxu0 %v519
    %1947 = vmatpush.msra.mxu0 %v511
    %1948 = vmatpush.msra.mxu0 %v503
    %1949 = vmatpush.msra.mxu0 %v495
    %1950 = vmatpush.msra.mxu0 %v487
    %1951 = vmatpush.msra.mxu0 %v479
    %1952 = vmatpush.msra.mxu0 %v471
    %1953 = vmatpush.msra.mxu0 %v463
    %1954 = vmatpush.msra.mxu0 %v455
    %1955 = vmatpush.msra.mxu0 %v447
    %1956 = vmatpush.msra.mxu0 %v439
    %1957 = vmatmul.f32.gmra.mxu0 %v52
    %v1958 = vpop.f32.mrf.mxu0
    %v1959 = vadd.f32 %v1939, %v1958
    %1960 = vdwg.mxu0
    %1961 = vmatpush.msra.mxu0 %v176
    %1962 = vmatpush.msra.mxu0 %v168
    %1963 = vmatpush.msra.mxu0 %v160
    %1964 = vmatpush.msra.mxu0 %v152
    %1965 = vmatpush.msra.mxu0 %v144
    %1966 = vmatpush.msra.mxu0 %v136
    %1967 = vmatpush.msra.mxu0 %v128
    %1968 = vmatpush.msra.mxu0 %v120
    %1969 = vmatpush.msra.mxu0 %v112
    %1970 = vmatpush.msra.mxu0 %v104
    %1971 = vmatpush.msra.mxu0 %v96
    %1972 = vmatpush.msra.mxu0 %v88
    %1973 = vmatpush.msra.mxu0 %v80
    %1974 = vmatpush.msra.mxu0 %v72
    %1975 = vmatpush.msra.mxu0 %v64
    %1976 = vmatpush.msra.mxu0 %v56
    %1977 = vmatmul.f32.gmra.mxu0 %v49
    %v1978 = vpop.f32.mrf.mxu0
    %v1979 = vadd.f32 %v1399, %v1978
    %1980 = vdwg.mxu0
    %1981 = vmatpush.msra.mxu0 %v304
    %1982 = vmatpush.msra.mxu0 %v296
    %1983 = vmatpush.msra.mxu0 %v288
    %1984 = vmatpush.msra.mxu0 %v280
    %1985 = vmatpush.msra.mxu0 %v272
    %1986 = vmatpush.msra.mxu0 %v264
    %1987 = vmatpush.msra.mxu0 %v256
    %1988 = vmatpush.msra.mxu0 %v248
    %1989 = vmatpush.msra.mxu0 %v240
    %1990 = vmatpush.msra.mxu0 %v232
    %1991 = vmatpush.msra.mxu0 %v224
    %1992 = vmatpush.msra.mxu0 %v216
    %1993 = vmatpush.msra.mxu0 %v208
    %1994 = vmatpush.msra.mxu0 %v200
    %1995 = vmatpush.msra.mxu0 %v192
    %1996 = vmatpush.msra.mxu0 %v184
    %1997 = vmatmul.f32.gmra.mxu0 %v50
    %v1998 = vpop.f32.mrf.mxu0
    %v1999 = vadd.f32 %v1979, %v1998
    %2000 = vdwg.mxu0
    %2001 = vmatpush.msra.mxu0 %v432
    %2002 = vmatpush.msra.mxu0 %v424
    %2003 = vmatpush.msra.mxu0 %v416
    %2004 = vmatpush.msra.mxu0 %v408
    %2005 = vmatpush.msra.mxu0 %v400
    %2006 = vmatpush.msra.mxu0 %v392
    %2007 = vmatpush.msra.mxu0 %v384
    %2008 = vmatpush.msra.mxu0 %v376
    %2009 = vmatpush.msra.mxu0 %v368
    %2010 = vmatpush.msra.mxu0 %v360
    %2011 = vmatpush.msra.mxu0 %v352
    %2012 = vmatpush.msra.mxu0 %v344
    %2013 = vmatpush.msra.mxu0 %v336
    %2014 = vmatpush.msra.mxu0 %v328
    %2015 = vmatpush.msra.mxu0 %v320
    %2016 = vmatpush.msra.mxu0 %v312
    %2017 = vmatmul.f32.gmra.mxu0 %v51
    %v2018 = vpop.f32.mrf.mxu0
    %v2019 = vadd.f32 %v1999, %v2018
    %2020 = vdwg.mxu0
    %2021 = vmatpush.msra.mxu0 %v560
    %2022 = vmatpush.msra.mxu0 %v552
    %2023 = vmatpush.msra.mxu0 %v544
    %2024 = vmatpush.msra.mxu0 %v536
    %2025 = vmatpush.msra.mxu0 %v528
    %2026 = vmatpush.msra.mxu0 %v520
    %2027 = vmatpush.msra.mxu0 %v512
    %2028 = vmatpush.msra.mxu0 %v504
    %2029 = vmatpush.msra.mxu0 %v496
    %2030 = vmatpush.msra.mxu0 %v488
    %2031 = vmatpush.msra.mxu0 %v480
    %2032 = vmatpush.msra.mxu0 %v472
    %2033 = vmatpush.msra.mxu0 %v464
    %2034 = vmatpush.msra.mxu0 %v456
    %2035 = vmatpush.msra.mxu0 %v448
    %2036 = vmatpush.msra.mxu0 %v440
    %2037 = vmatmul.f32.gmra.mxu0 %v52
    %v2038 = vpop.f32.mrf.mxu0
    %v2039 = vadd.f32 %v2019, %v2038
    %2040 = vdwg.mxu0
    %2041 = vmatpush.msra.mxu0 %v177
    %2042 = vmatpush.msra.mxu0 %v169
    %2043 = vmatpush.msra.mxu0 %v161
    %2044 = vmatpush.msra.mxu0 %v153
    %2045 = vmatpush.msra.mxu0 %v145
    %2046 = vmatpush.msra.mxu0 %v137
    %2047 = vmatpush.msra.mxu0 %v129
    %2048 = vmatpush.msra.mxu0 %v121
    %2049 = vmatpush.msra.mxu0 %v113
    %2050 = vmatpush.msra.mxu0 %v105
    %2051 = vmatpush.msra.mxu0 %v97
    %2052 = vmatpush.msra.mxu0 %v89
    %2053 = vmatpush.msra.mxu0 %v81
    %2054 = vmatpush.msra.mxu0 %v73
    %2055 = vmatpush.msra.mxu0 %v65
    %2056 = vmatpush.msra.mxu0 %v57
    %2057 = vmatmul.f32.gmra.mxu0 %v49
    %v2058 = vpop.f32.mrf.mxu0
    %v2059 = vadd.f32 %v1479, %v2058
    %2060 = vdwg.mxu0
    %2061 = vmatpush.msra.mxu0 %v305
    %2062 = vmatpush.msra.mxu0 %v297
    %2063 = vmatpush.msra.mxu0 %v289
    %2064 = vmatpush.msra.mxu0 %v281
    %2065 = vmatpush.msra.mxu0 %v273
    %2066 = vmatpush.msra.mxu0 %v265
    %2067 = vmatpush.msra.mxu0 %v257
    %2068 = vmatpush.msra.mxu0 %v249
    %2069 = vmatpush.msra.mxu0 %v241
    %2070 = vmatpush.msra.mxu0 %v233
    %2071 = vmatpush.msra.mxu0 %v225
    %2072 = vmatpush.msra.mxu0 %v217
    %2073 = vmatpush.msra.mxu0 %v209
    %2074 = vmatpush.msra.mxu0 %v201
    %2075 = vmatpush.msra.mxu0 %v193
    %2076 = vmatpush.msra.mxu0 %v185
    %2077 = vmatmul.f32.gmra.mxu0 %v50
    %v2078 = vpop.f32.mrf.mxu0
    %v2079 = vadd.f32 %v2059, %v2078
    %2080 = vdwg.mxu0
    %2081 = vmatpush.msra.mxu0 %v433
    %2082 = vmatpush.msra.mxu0 %v425
    %2083 = vmatpush.msra.mxu0 %v417
    %2084 = vmatpush.msra.mxu0 %v409
    %2085 = vmatpush.msra.mxu0 %v401
    %2086 = vmatpush.msra.mxu0 %v393
    %2087 = vmatpush.msra.mxu0 %v385
    %2088 = vmatpush.msra.mxu0 %v377
    %2089 = vmatpush.msra.mxu0 %v369
    %2090 = vmatpush.msra.mxu0 %v361
    %2091 = vmatpush.msra.mxu0 %v353
    %2092 = vmatpush.msra.mxu0 %v345
    %2093 = vmatpush.msra.mxu0 %v337
    %2094 = vmatpush.msra.mxu0 %v329
    %2095 = vmatpush.msra.mxu0 %v321
    %2096 = vmatpush.msra.mxu0 %v313
    %2097 = vmatmul.f32.gmra.mxu0 %v51
    %v2098 = vpop.f32.mrf.mxu0
    %v2099 = vadd.f32 %v2079, %v2098
    %2100 = vdwg.mxu0
    %2101 = vmatpush.msra.mxu0 %v561
    %2102 = vmatpush.msra.mxu0 %v553
    %2103 = vmatpush.msra.mxu0 %v545
    %2104 = vmatpush.msra.mxu0 %v537
    %2105 = vmatpush.msra.mxu0 %v529
    %2106 = vmatpush.msra.mxu0 %v521
    %2107 = vmatpush.msra.mxu0 %v513
    %2108 = vmatpush.msra.mxu0 %v505
    %2109 = vmatpush.msra.mxu0 %v497
    %2110 = vmatpush.msra.mxu0 %v489
    %2111 = vmatpush.msra.mxu0 %v481
    %2112 = vmatpush.msra.mxu0 %v473
    %2113 = vmatpush.msra.mxu0 %v465
    %2114 = vmatpush.msra.mxu0 %v457
    %2115 = vmatpush.msra.mxu0 %v449
    %2116 = vmatpush.msra.mxu0 %v441
    %2117 = vmatmul.f32.gmra.mxu0 %v52
    %v2118 = vpop.f32.mrf.mxu0
    %v2119 = vadd.f32 %v2099, %v2118
    %2120 = vdwg.mxu0
    %2121 = vmatpush.msra.mxu0 %v178
    %2122 = vmatpush.msra.mxu0 %v170
    %2123 = vmatpush.msra.mxu0 %v162
    %2124 = vmatpush.msra.mxu0 %v154
    %2125 = vmatpush.msra.mxu0 %v146
    %2126 = vmatpush.msra.mxu0 %v138
    %2127 = vmatpush.msra.mxu0 %v130
    %2128 = vmatpush.msra.mxu0 %v122
    %2129 = vmatpush.msra.mxu0 %v114
    %2130 = vmatpush.msra.mxu0 %v106
    %2131 = vmatpush.msra.mxu0 %v98
    %2132 = vmatpush.msra.mxu0 %v90
    %2133 = vmatpush.msra.mxu0 %v82
    %2134 = vmatpush.msra.mxu0 %v74
    %2135 = vmatpush.msra.mxu0 %v66
    %2136 = vmatpush.msra.mxu0 %v58
    %2137 = vmatmul.f32.gmra.mxu0 %v49
    %v2138 = vpop.f32.mrf.mxu0
    %v2139 = vadd.f32 %v1559, %v2138
    %2140 = vdwg.mxu0
    %2141 = vmatpush.msra.mxu0 %v306
    %2142 = vmatpush.msra.mxu0 %v298
    %2143 = vmatpush.msra.mxu0 %v290
    %2144 = vmatpush.msra.mxu0 %v282
    %2145 = vmatpush.msra.mxu0 %v274
    %2146 = vmatpush.msra.mxu0 %v266
    %2147 = vmatpush.msra.mxu0 %v258
    %2148 = vmatpush.msra.mxu0 %v250
    %2149 = vmatpush.msra.mxu0 %v242
    %2150 = vmatpush.msra.mxu0 %v234
    %2151 = vmatpush.msra.mxu0 %v226
    %2152 = vmatpush.msra.mxu0 %v218
    %2153 = vmatpush.msra.mxu0 %v210
    %2154 = vmatpush.msra.mxu0 %v202
    %2155 = vmatpush.msra.mxu0 %v194
    %2156 = vmatpush.msra.mxu0 %v186
    %2157 = vmatmul.f32.gmra.mxu0 %v50
    %v2158 = vpop.f32.mrf.mxu0
    %v2159 = vadd.f32 %v2139, %v2158
    %2160 = vdwg.mxu0
    %2161 = vmatpush.msra.mxu0 %v434
    %2162 = vmatpush.msra.mxu0 %v426
    %2163 = vmatpush.msra.mxu0 %v418
    %2164 = vmatpush.msra.mxu0 %v410
    %2165 = vmatpush.msra.mxu0 %v402
    %2166 = vmatpush.msra.mxu0 %v394
    %2167 = vmatpush.msra.mxu0 %v386
    %2168 = vmatpush.msra.mxu0 %v378
    %2169 = vmatpush.msra.mxu0 %v370
    %2170 = vmatpush.msra.mxu0 %v362
    %2171 = vmatpush.msra.mxu0 %v354
    %2172 = vmatpush.msra.mxu0 %v346
    %2173 = vmatpush.msra.mxu0 %v338
    %2174 = vmatpush.msra.mxu0 %v330
    %2175 = vmatpush.msra.mxu0 %v322
    %2176 = vmatpush.msra.mxu0 %v314
    %2177 = vmatmul.f32.gmra.mxu0 %v51
    %v2178 = vpop.f32.mrf.mxu0
    %v2179 = vadd.f32 %v2159, %v2178
    %2180 = vdwg.mxu0
    %2181 = vmatpush.msra.mxu0 %v562
    %2182 = vmatpush.msra.mxu0 %v554
    %2183 = vmatpush.msra.mxu0 %v546
    %2184 = vmatpush.msra.mxu0 %v538
    %2185 = vmatpush.msra.mxu0 %v530
    %2186 = vmatpush.msra.mxu0 %v522
    %2187 = vmatpush.msra.mxu0 %v514
    %2188 = vmatpush.msra.mxu0 %v506
    %2189 = vmatpush.msra.mxu0 %v498
    %2190 = vmatpush.msra.mxu0 %v490
    %2191 = vmatpush.msra.mxu0 %v482
    %2192 = vmatpush.msra.mxu0 %v474
    %2193 = vmatpush.msra.mxu0 %v466
    %2194 = vmatpush.msra.mxu0 %v458
    %2195 = vmatpush.msra.mxu0 %v450
    %2196 = vmatpush.msra.mxu0 %v442
    %2197 = vmatmul.f32.gmra.mxu0 %v52
    %v2198 = vpop.f32.mrf.mxu0
    %v2199 = vadd.f32 %v2179, %v2198
    %2200 = vdwg.mxu0
    %2201 = vmatpush.msra.mxu0 %v179
    %2202 = vmatpush.msra.mxu0 %v171
    %2203 = vmatpush.msra.mxu0 %v163
    %2204 = vmatpush.msra.mxu0 %v155
    %2205 = vmatpush.msra.mxu0 %v147
    %2206 = vmatpush.msra.mxu0 %v139
    %2207 = vmatpush.msra.mxu0 %v131
    %2208 = vmatpush.msra.mxu0 %v123
    %2209 = vmatpush.msra.mxu0 %v115
    %2210 = vmatpush.msra.mxu0 %v107
    %2211 = vmatpush.msra.mxu0 %v99
    %2212 = vmatpush.msra.mxu0 %v91
    %2213 = vmatpush.msra.mxu0 %v83
    %2214 = vmatpush.msra.mxu0 %v75
    %2215 = vmatpush.msra.mxu0 %v67
    %2216 = vmatpush.msra.mxu0 %v59
    %2217 = vmatmul.f32.gmra.mxu0 %v49
    %v2218 = vpop.f32.mrf.mxu0
    %v2219 = vadd.f32 %v1639, %v2218
    %2220 = vdwg.mxu0
    %2221 = vmatpush.msra.mxu0 %v307
    %2222 = vmatpush.msra.mxu0 %v299
    %2223 = vmatpush.msra.mxu0 %v291
    %2224 = vmatpush.msra.mxu0 %v283
    %2225 = vmatpush.msra.mxu0 %v275
    %2226 = vmatpush.msra.mxu0 %v267
    %2227 = vmatpush.msra.mxu0 %v259
    %2228 = vmatpush.msra.mxu0 %v251
    %2229 = vmatpush.msra.mxu0 %v243
    %2230 = vmatpush.msra.mxu0 %v235
    %2231 = vmatpush.msra.mxu0 %v227
    %2232 = vmatpush.msra.mxu0 %v219
    %2233 = vmatpush.msra.mxu0 %v211
    %2234 = vmatpush.msra.mxu0 %v203
    %2235 = vmatpush.msra.mxu0 %v195
    %2236 = vmatpush.msra.mxu0 %v187
    %2237 = vmatmul.f32.gmra.mxu0 %v50
    %v2238 = vpop.f32.mrf.mxu0
    %v2239 = vadd.f32 %v2219, %v2238
    %2240 = vdwg.mxu0
    %2241 = vmatpush.msra.mxu0 %v435
    %2242 = vmatpush.msra.mxu0 %v427
    %2243 = vmatpush.msra.mxu0 %v419
    %2244 = vmatpush.msra.mxu0 %v411
    %2245 = vmatpush.msra.mxu0 %v403
    %2246 = vmatpush.msra.mxu0 %v395
    %2247 = vmatpush.msra.mxu0 %v387
    %2248 = vmatpush.msra.mxu0 %v379
    %2249 = vmatpush.msra.mxu0 %v371
    %2250 = vmatpush.msra.mxu0 %v363
    %2251 = vmatpush.msra.mxu0 %v355
    %2252 = vmatpush.msra.mxu0 %v347
    %2253 = vmatpush.msra.mxu0 %v339
    %2254 = vmatpush.msra.mxu0 %v331
    %2255 = vmatpush.msra.mxu0 %v323
    %2256 = vmatpush.msra.mxu0 %v315
    %2257 = vmatmul.f32.gmra.mxu0 %v51
    %v2258 = vpop.f32.mrf.mxu0
    %v2259 = vadd.f32 %v2239, %v2258
    %2260 = vdwg.mxu0
    %2261 = vmatpush.msra.mxu0 %v563
    %2262 = vmatpush.msra.mxu0 %v555
    %2263 = vmatpush.msra.mxu0 %v547
    %2264 = vmatpush.msra.mxu0 %v539
    %2265 = vmatpush.msra.mxu0 %v531
    %2266 = vmatpush.msra.mxu0 %v523
    %2267 = vmatpush.msra.mxu0 %v515
    %2268 = vmatpush.msra.mxu0 %v507
    %2269 = vmatpush.msra.mxu0 %v499
    %2270 = vmatpush.msra.mxu0 %v491
    %2271 = vmatpush.msra.mxu0 %v483
    %2272 = vmatpush.msra.mxu0 %v475
    %2273 = vmatpush.msra.mxu0 %v467
    %2274 = vmatpush.msra.mxu0 %v459
    %2275 = vmatpush.msra.mxu0 %v451
    %2276 = vmatpush.msra.mxu0 %v443
    %2277 = vmatmul.f32.gmra.mxu0 %v52
    %v2278 = vpop.f32.mrf.mxu0
    %v2279 = vadd.f32 %v2259, %v2278
    %2280 = vdwg.mxu0
    %2281 = vmatpush.msra.mxu0 %v180
    %2282 = vmatpush.msra.mxu0 %v172
    %2283 = vmatpush.msra.mxu0 %v164
    %2284 = vmatpush.msra.mxu0 %v156
    %2285 = vmatpush.msra.mxu0 %v148
    %2286 = vmatpush.msra.mxu0 %v140
    %2287 = vmatpush.msra.mxu0 %v132
    %2288 = vmatpush.msra.mxu0 %v124
    %2289 = vmatpush.msra.mxu0 %v116
    %2290 = vmatpush.msra.mxu0 %v108
    %2291 = vmatpush.msra.mxu0 %v100
    %2292 = vmatpush.msra.mxu0 %v92
    %2293 = vmatpush.msra.mxu0 %v84
    %2294 = vmatpush.msra.mxu0 %v76
    %2295 = vmatpush.msra.mxu0 %v68
    %2296 = vmatpush.msra.mxu0 %v60
    %2297 = vmatmul.f32.gmra.mxu0 %v49
    %v2298 = vpop.f32.mrf.mxu0
    %v2299 = vadd.f32 %v1719, %v2298
    %2300 = vdwg.mxu0
    %2301 = vmatpush.msra.mxu0 %v308
    %2302 = vmatpush.msra.mxu0 %v300
    %2303 = vmatpush.msra.mxu0 %v292
    %2304 = vmatpush.msra.mxu0 %v284
    %2305 = vmatpush.msra.mxu0 %v276
    %2306 = vmatpush.msra.mxu0 %v268
    %2307 = vmatpush.msra.mxu0 %v260
    %2308 = vmatpush.msra.mxu0 %v252
    %2309 = vmatpush.msra.mxu0 %v244
    %2310 = vmatpush.msra.mxu0 %v236
    %2311 = vmatpush.msra.mxu0 %v228
    %2312 = vmatpush.msra.mxu0 %v220
    %2313 = vmatpush.msra.mxu0 %v212
    %2314 = vmatpush.msra.mxu0 %v204
    %2315 = vmatpush.msra.mxu0 %v196
    %2316 = vmatpush.msra.mxu0 %v188
    %2317 = vmatmul.f32.gmra.mxu0 %v50
    %v2318 = vpop.f32.mrf.mxu0
    %v2319 = vadd.f32 %v2299, %v2318
    %2320 = vdwg.mxu0
    %2321 = vmatpush.msra.mxu0 %v436
    %2322 = vmatpush.msra.mxu0 %v428
    %2323 = vmatpush.msra.mxu0 %v420
    %2324 = vmatpush.msra.mxu0 %v412
    %2325 = vmatpush.msra.mxu0 %v404
    %2326 = vmatpush.msra.mxu0 %v396
    %2327 = vmatpush.msra.mxu0 %v388
    %2328 = vmatpush.msra.mxu0 %v380
    %2329 = vmatpush.msra.mxu0 %v372
    %2330 = vmatpush.msra.mxu0 %v364
    %2331 = vmatpush.msra.mxu0 %v356
    %2332 = vmatpush.msra.mxu0 %v348
    %2333 = vmatpush.msra.mxu0 %v340
    %2334 = vmatpush.msra.mxu0 %v332
    %2335 = vmatpush.msra.mxu0 %v324
    %2336 = vmatpush.msra.mxu0 %v316
    %2337 = vmatmul.f32.gmra.mxu0 %v51
    %v2338 = vpop.f32.mrf.mxu0
    %v2339 = vadd.f32 %v2319, %v2338
    %2340 = vdwg.mxu0
    %2341 = vmatpush.msra.mxu0 %v564
    %2342 = vmatpush.msra.mxu0 %v556
    %2343 = vmatpush.msra.mxu0 %v548
    %2344 = vmatpush.msra.mxu0 %v540
    %2345 = vmatpush.msra.mxu0 %v532
    %2346 = vmatpush.msra.mxu0 %v524
    %2347 = vmatpush.msra.mxu0 %v516
    %2348 = vmatpush.msra.mxu0 %v508
    %2349 = vmatpush.msra.mxu0 %v500
    %2350 = vmatpush.msra.mxu0 %v492
    %2351 = vmatpush.msra.mxu0 %v484
    %2352 = vmatpush.msra.mxu0 %v476
    %2353 = vmatpush.msra.mxu0 %v468
    %2354 = vmatpush.msra.mxu0 %v460
    %2355 = vmatpush.msra.mxu0 %v452
    %2356 = vmatpush.msra.mxu0 %v444
    %2357 = vmatmul.f32.gmra.mxu0 %v52
    %v2358 = vpop.f32.mrf.mxu0
    %v2359 = vadd.f32 %v2339, %v2358
    %2360 = vdwg.mxu0
    %2361 = vst [vmem:[%s4] sm:$0xff] %v1799
    %2362 = vst [vmem:[%s4 + $0x8] sm:$0xff] %v1879
    %2363 = vst [vmem:[%s4 + $0x10] sm:$0xff] %v1959
    %2364 = vst [vmem:[%s4 + $0x18] sm:$0xff] %v2039
    %2365 = vst [vmem:[%s4 + $0x20] sm:$0xff] %v2119
    %2366 = vst [vmem:[%s4 + $0x28] sm:$0xff] %v2199
    %2367 = vst [vmem:[%s4 + $0x30] sm:$0xff] %v2279
    %2368 = vst [vmem:[%s4 + $0x38] sm:$0xff] %v2359
    // Predicated region
    $region26: #{_fourier_merge_impl.1} parent=1 // pred_check
      _
    $region27: #{_fourier_merge_impl.1} parent=1 // pred_check_branch
      %2370 = sbr.rel (0) target = $region29
    $region28: #{_fourier_merge_impl.1} parent=1 // pred_region
      _
    $region29: #{_fourier_merge_impl.1} parent=1 // pred_fallthru
      _
    // Predicated region
    $region30: #{_fourier_merge_impl.1} parent=1 // pred_check
      _
    $region31: #{_fourier_merge_impl.1} parent=1 // pred_check_branch
      %2372 = sbr.rel (0) target = $region33
    $region32: #{_fourier_merge_impl.1} parent=1 // pred_region
      _
    $region33: #{_fourier_merge_impl.1} parent=1 // pred_fallthru
      _
    %2373 = vsyncpa [#allocation3], 1
    %2374 = vsyncpa [#allocation5], 1

</llo_original>
